<compile_context>
chip_gen: v6e
topology: v6e:2x2x1
jax: 0.10.0
libtpu: 0.0.40
codegen_flags: <defaults>
</compile_context>

<pallas_src>
import functools

import jax
import jax.numpy as jnp
from jax import lax
from jax.experimental import pallas as pl
from jax.experimental.pallas import tpu as pltpu

EPS = 1e-5


def _decoder_block_kernel(x_ref, w1_ref, wab_ref, wcd_ref, w3_ref,
                          g1_ref, be1_ref, g2_ref, be2_ref, g3_ref, be3_ref,
                          o_ref, *, H, C4, F, cnt1, cnt2, mm_dtype):
    R = x_ref.shape[0]                                   # N*H packed rows

    def mm(a, b):
        return jnp.dot(a.astype(mm_dtype), b.astype(mm_dtype),
                       preferred_element_type=jnp.float32)

    def pool_bcast(v, c):
        # v: (1, GC) per-lane sums.  Returns, at every lane l, the sum pooled
        # over all lanes with the same real channel (l % c) -- i.e. pooled AND
        # broadcast back in one step.
        #  * lane-dense, power-of-two group count: log-tree of XLU lane
        #    rotations (direction-agnostic, stays f32).
        #  * otherwise: tiny 0/1 matrix matmul on the MXU (matrix built from
        #    iota in-kernel; no extra operand / DMA).
        gc = v.shape[1]
        groups = gc // c
        if gc % 128 == 0 and (groups & (groups - 1)) == 0:
            shift = c
            while shift < gc:
                v = v + pltpu.roll(v, shift, axis=1)
                shift *= 2
            return v
        li = lax.broadcasted_iota(jnp.int32, (gc, gc), 0)
        co = lax.broadcasted_iota(jnp.int32, (gc, gc), 1)
        q = (li % c == co % c).astype(jnp.float32)
        return jnp.dot(v, q, preferred_element_type=jnp.float32)

    def bn_relu(y, gamma, beta, c, cnt):
        # Training-mode BatchNorm2d (biased variance, eps=1e-5) + ReLU folded
        # into a single scale/shift FMA.  gamma/beta arrive pre-tiled to the
        # packed lane width.  All statistics in f32.
        s = pool_bcast(jnp.sum(y, axis=0, keepdims=True), c)
        s2 = pool_bcast(jnp.sum(y * y, axis=0, keepdims=True), c)
        mean = s / cnt
        var = s2 / cnt - mean * mean
        scale = gamma * lax.rsqrt(var + EPS)
        shift = beta - mean * scale
        return jnp.maximum(y * scale + shift, 0.0)

    # ---- conv1 (1x1): block-diagonal over the W packed pixels --------------
    h1 = mm(x_ref[...], w1_ref[...])                     # (R, W*C4)
    h1 = bn_relu(h1, g1_ref[...], be1_ref[...], C4, cnt1)

    # ---- deconv2 (3x3, stride 2, pad 1, output_pad 1), parity-packed -------
    # In-row (j+1) taps are folded into wab/wcd via a sub-diagonal kron built
    # in the wrapper; the cross-row (i+1) taps need one sublane roll (XLU)
    # plus a last-image-row mask.  result[r] = h1[r+1].
    rows = lax.broadcasted_iota(jnp.int32, (R, 1), 0)
    last_row = (rows % H) == (H - 1)
    h1_dn = jnp.where(last_row, 0.0, pltpu.roll(h1, R - 1, axis=0))
    y2 = mm(h1, wab_ref[...]) + mm(h1_dn, wcd_ref[...])  # (R, W*4*C4)
    y2 = bn_relu(y2, g2_ref[...], be2_ref[...], C4, cnt2)

    # ---- conv3 (1x1), block-diagonal over the W*4 (pixel, parity) groups ---
    y3 = mm(y2, w3_ref[...])                             # (R, W*4*F)
    y3 = bn_relu(y3, g3_ref[...], be3_ref[...], F, cnt2)

    o_ref[...] = y3.astype(o_ref.dtype)                  # lane-dense store


def decoder_block(x_nchw, params, *, mm_dtype=jnp.float32):
    """Pallas implementation of DecoderBlock.forward (group=1)."""
    (w1, b1, g1, be1, wt2, b2, g2, be2, w3, b3, g3, be3) = params
    del b1, b2, b3  # conv biases cancel exactly under training-mode BN
    N, Cin, H, W = x_nchw.shape
    C4 = w1.shape[0]                       # conv1 weight: (C4, Cin, 1, 1)
    F = w3.shape[0]                        # conv3 weight: (F, C4, 1, 1)
    R = N * H
    f32 = jnp.float32

    # input: NCHW -> rows (n, h), lanes (w, cin)  => (N*H, W*Cin), lane-dense
    x2d = jnp.transpose(x_nchw, (0, 2, 3, 1)).reshape(R, W * Cin).astype(f32)

    eye_w = jnp.eye(W, dtype=f32)
    sub_w = jnp.eye(W, k=-1, dtype=f32)    # output pixel j <- input pixel j+1

    # conv1 1x1 as block-diagonal (W*Cin, W*C4)
    w1m = jnp.transpose(w1.reshape(C4, Cin), (1, 0)).astype(f32)  # (Cin, C4)
    w1k = jnp.kron(eye_w, w1m)

    # transposed-conv taps; columns = output parities [(0,0)|(0,1)|(1,0)|(1,1)]
    tap = lambda kh, kw: wt2[:, :, kh, kw].astype(f32)            # (C4, C4)
    Z = jnp.zeros((C4, C4), f32)
    w_a = jnp.concatenate([tap(1, 1), tap(1, 2), tap(2, 1), tap(2, 2)], axis=1)
    w_b = jnp.concatenate([Z,         tap(1, 0), Z,         tap(2, 0)], axis=1)
    w_c = jnp.concatenate([Z,         Z,         tap(0, 1), tap(0, 2)], axis=1)
    w_d = jnp.concatenate([Z,         Z,         Z,         tap(0, 0)], axis=1)
    # fold the (j+1) shift into the weight through the sub-diagonal kron; the
    # right-edge masking falls out of the zero column it leaves behind.
    w_ab = jnp.kron(eye_w, w_a) + jnp.kron(sub_w, w_b)   # acts on h1[i,   :]
    w_cd = jnp.kron(eye_w, w_c) + jnp.kron(sub_w, w_d)   # acts on h1[i+1, :]

    # conv3 1x1 block-diagonal over the W*4 (pixel, parity) groups
    w3m = jnp.transpose(w3.reshape(F, C4), (1, 0)).astype(f32)    # (C4, F)
    w3k = jnp.kron(jnp.eye(W * 4, dtype=f32), w3m)                # (4WC4, 4WF)

    # BN affine params pre-tiled to the packed lane widths
    g1t = jnp.tile(g1.reshape(1, C4).astype(f32), (1, W))
    be1t = jnp.tile(be1.reshape(1, C4).astype(f32), (1, W))
    g2t = jnp.tile(g2.reshape(1, C4).astype(f32), (1, 4 * W))
    be2t = jnp.tile(be2.reshape(1, C4).astype(f32), (1, 4 * W))
    g3t = jnp.tile(g3.reshape(1, F).astype(f32), (1, 4 * W))
    be3t = jnp.tile(be3.reshape(1, F).astype(f32), (1, 4 * W))

    vspec = pl.BlockSpec(memory_space=pltpu.MemorySpace.VMEM)
    kern = functools.partial(_decoder_block_kernel, H=H, C4=C4, F=F,
                             cnt1=float(N * H * W), cnt2=float(N * H * W * 4),
                             mm_dtype=mm_dtype)
    packed = pl.pallas_call(
        kern,
        out_shape=jax.ShapeDtypeStruct((R, W * 4 * F), jnp.float32),
        in_specs=[vspec] * 11,
        out_specs=vspec,
    )(x2d, w1k, w_ab, w_cd, w3k, g1t, be1t, g2t, be2t, g3t, be3t)

    # un-pack parities: rows (n, h), lanes (w, py, px, f) -> (N, F, 2H, 2W)
    y = packed.reshape(N, H, W, 2, 2, F)
    y = jnp.transpose(y, (0, 5, 1, 3, 2, 4)).reshape(N, F, 2 * H, 2 * W)
    return y


def _reference(x, params):
    """Pure-JAX reference matching torch semantics (NCHW, training-mode BN)."""
    (w1, b1, g1, be1, wt2, b2, g2, be2, w3, b3, g3, be3) = params
    hp = lax.Precision.HIGHEST

    def bn(y, g, b):
        mean = y.mean(axis=(0, 2, 3), keepdims=True)
        var = ((y - mean) ** 2).mean(axis=(0, 2, 3), keepdims=True)
        return (y - mean) / jnp.sqrt(var + EPS) * g.reshape(1, -1, 1, 1) \
            + b.reshape(1, -1, 1, 1)

    def conv1x1(y, w, b):
        out = lax.conv_general_dilated(
            y, w, (1, 1), ((0, 0), (0, 0)),
            dimension_numbers=("NCHW", "OIHW", "NCHW"), precision=hp)
        return out + b.reshape(1, -1, 1, 1)

    def deconv(y, wt, b):
        # ConvTranspose2d(k=3, stride=2, padding=1, output_padding=1)
        w = jnp.flip(wt, axis=(2, 3)).transpose(1, 0, 2, 3)   # (Cout,Cin,kh,kw)
        out = lax.conv_general_dilated(
            y, w, (1, 1), ((1, 2), (1, 2)), lhs_dilation=(2, 2),
            dimension_numbers=("NCHW", "OIHW", "NCHW"), precision=hp)
        return out + b.reshape(1, -1, 1, 1)

    h = jax.nn.relu(bn(conv1x1(x, w1, b1), g1, be1))
    h = jax.nn.relu(bn(deconv(h, wt2, b2), g2, be2))
    h = jax.nn.relu(bn(conv1x1(h, w3, b3), g3, be3))
    return h


if __name__ == "__main__":
    N, Cin, H, W = 2, 16, 16, 16          # in_channels=16 -> C4 = 4
    n_filters = 8
    C4 = Cin // 4

    key = jax.random.PRNGKey(0)
    ks = jax.random.split(key, 13)

    x = jax.random.normal(ks[0], (N, Cin, H, W), dtype=jnp.float32)
    # conv1: (C4, Cin, 1, 1), bias (C4,)
    w1 = jax.random.normal(ks[1], (C4, Cin, 1, 1), jnp.float32) * (2.0 / (1 * 1 * C4)) ** 0.5
    b1 = 0.1 * jax.random.normal(ks[2], (C4,), jnp.float32)
    g1 = 1.0 + 0.1 * jax.random.normal(ks[3], (C4,), jnp.float32)
    be1 = 0.1 * jax.random.normal(ks[4], (C4,), jnp.float32)
    # deconv2: ConvTranspose2d weight (Cin=C4, Cout=C4, 3, 3), bias (C4,)
    wt2 = jax.random.normal(ks[5], (C4, C4, 3, 3), jnp.float32) * (2.0 / (3 * 3 * C4)) ** 0.5
    b2 = 0.1 * jax.random.normal(ks[6], (C4,), jnp.float32)
    g2 = 1.0 + 0.1 * jax.random.normal(ks[7], (C4,), jnp.float32)
    be2 = 0.1 * jax.random.normal(ks[8], (C4,), jnp.float32)
    # conv3: (F, C4, 1, 1), bias (F,)
    w3 = jax.random.normal(ks[9], (n_filters, C4, 1, 1), jnp.float32) * (2.0 / (1 * 1 * n_filters)) ** 0.5
    b3 = 0.1 * jax.random.normal(ks[10], (n_filters,), jnp.float32)
    g3 = 1.0 + 0.1 * jax.random.normal(ks[11], (n_filters,), jnp.float32)
    be3 = 0.1 * jax.random.normal(ks[12], (n_filters,), jnp.float32)

    params = (w1, b1, g1, be1, wt2, b2, g2, be2, w3, b3, g3, be3)

    out = jax.block_until_ready(decoder_block(x, params))
    ref = jax.block_until_ready(_reference(x, params))

    assert out.shape == (N, n_filters, 2 * H, 2 * W), out.shape
    err = jnp.max(jnp.abs(out - ref))
    assert jnp.allclose(out, ref, atol=1e-4, rtol=1e-4), f"max abs err {err}"

    print("KERNEL_OK")
</pallas_src>

<mosaic_0001>
module attributes {stable_mosaic.version = 11 : i64} {
  func.func @_decoder_block_kernel(%arg0: memref<32x256xf32, #tpu.memory_space<vmem>>, %arg1: memref<256x64xf32, #tpu.memory_space<vmem>>, %arg2: memref<64x256xf32, #tpu.memory_space<vmem>>, %arg3: memref<64x256xf32, #tpu.memory_space<vmem>>, %arg4: memref<256x512xf32, #tpu.memory_space<vmem>>, %arg5: memref<1x64xf32, #tpu.memory_space<vmem>>, %arg6: memref<1x64xf32, #tpu.memory_space<vmem>>, %arg7: memref<1x256xf32, #tpu.memory_space<vmem>>, %arg8: memref<1x256xf32, #tpu.memory_space<vmem>>, %arg9: memref<1x512xf32, #tpu.memory_space<vmem>>, %arg10: memref<1x512xf32, #tpu.memory_space<vmem>>, %arg11: memref<32x512xf32, #tpu.memory_space<vmem>>) attributes {dimension_semantics = [], scalar_prefetch = 0 : i64, scratch_operands = 0 : i64, tpu.core_type = #tpu.core_type<tc>} {
    %c0 = arith.constant 0 : index
    %c0_0 = arith.constant 0 : index
    %0 = vector.load %arg0[%c0, %c0_0] : memref<32x256xf32, #tpu.memory_space<vmem>>, vector<32x256xf32>
    %c0_1 = arith.constant 0 : index
    %c0_2 = arith.constant 0 : index
    %1 = vector.load %arg1[%c0_1, %c0_2] : memref<256x64xf32, #tpu.memory_space<vmem>>, vector<256x64xf32>
    %cst = arith.constant dense<0.000000e+00> : vector<32x64xf32>
    %2 = tpu.matmul %0, %1, %cst {dimension_numbers = #tpu.dot_dimension_numbers<[1], [0], [0], [1], [0, 0, 1, 1], [], []>} : vector<32x256xf32>, vector<256x64xf32>, vector<32x64xf32> -> vector<32x64xf32>
    %c0_3 = arith.constant 0 : index
    %c0_4 = arith.constant 0 : index
    %3 = vector.load %arg5[%c0_3, %c0_4] : memref<1x64xf32, #tpu.memory_space<vmem>>, vector<1x64xf32>
    %c0_5 = arith.constant 0 : index
    %c0_6 = arith.constant 0 : index
    %4 = vector.load %arg6[%c0_5, %c0_6] : memref<1x64xf32, #tpu.memory_space<vmem>>, vector<1x64xf32>
    %cst_7 = arith.constant dense<0.000000e+00> : vector<64xf32>
    %5 = vector.multi_reduction <add>, %2, %cst_7 [0] : vector<32x64xf32> to vector<64xf32>
    %6 = vector.shape_cast %5 : vector<64xf32> to vector<1x64xf32>
    %7 = tpu.iota {dimensions = array<i32: 0>} : vector<64x64xi32>
    %8 = tpu.iota {dimensions = array<i32: 1>} : vector<64x64xi32>
    %c4_i32 = arith.constant 4 : i32
    %c0_i32 = arith.constant 0 : i32
    %9 = arith.cmpi eq, %c4_i32, %c0_i32 : i32
    %c1_i32 = arith.constant 1 : i32
    %10 = arith.select %9, %c1_i32, %c4_i32 : i32
    %11 = vector.broadcast %10 : i32 to vector<64x64xi32>
    %12 = arith.remsi %7, %11 : vector<64x64xi32>
    %c0_i32_8 = arith.constant 0 : i32
    %13 = vector.broadcast %c0_i32_8 : i32 to vector<64x64xi32>
    %14 = arith.cmpi ne, %12, %13 : vector<64x64xi32>
    %c0_i32_9 = arith.constant 0 : i32
    %15 = vector.broadcast %c0_i32_9 : i32 to vector<64x64xi32>
    %16 = arith.cmpi slt, %12, %15 : vector<64x64xi32>
    %c0_i32_10 = arith.constant 0 : i32
    %17 = arith.cmpi slt, %10, %c0_i32_10 : i32
    %18 = vector.broadcast %17 : i1 to vector<64x64xi1>
    %19 = vector.broadcast %18 : vector<64x64xi1> to vector<64x64xi1>
    %20 = arith.xori %16, %19 : vector<64x64xi1>
    %21 = arith.andi %20, %14 : vector<64x64xi1>
    %22 = vector.broadcast %10 : i32 to vector<64x64xi32>
    %23 = arith.addi %12, %22 : vector<64x64xi32>
    %24 = arith.select %21, %23, %12 : vector<64x64xi1>, vector<64x64xi32>
    %c4_i32_11 = arith.constant 4 : i32
    %c0_i32_12 = arith.constant 0 : i32
    %25 = arith.cmpi eq, %c4_i32_11, %c0_i32_12 : i32
    %c1_i32_13 = arith.constant 1 : i32
    %26 = arith.select %25, %c1_i32_13, %c4_i32_11 : i32
    %27 = vector.broadcast %26 : i32 to vector<64x64xi32>
    %28 = arith.remsi %8, %27 : vector<64x64xi32>
    %c0_i32_14 = arith.constant 0 : i32
    %29 = vector.broadcast %c0_i32_14 : i32 to vector<64x64xi32>
    %30 = arith.cmpi ne, %28, %29 : vector<64x64xi32>
    %c0_i32_15 = arith.constant 0 : i32
    %31 = vector.broadcast %c0_i32_15 : i32 to vector<64x64xi32>
    %32 = arith.cmpi slt, %28, %31 : vector<64x64xi32>
    %c0_i32_16 = arith.constant 0 : i32
    %33 = arith.cmpi slt, %26, %c0_i32_16 : i32
    %34 = vector.broadcast %33 : i1 to vector<64x64xi1>
    %35 = vector.broadcast %34 : vector<64x64xi1> to vector<64x64xi1>
    %36 = arith.xori %32, %35 : vector<64x64xi1>
    %37 = arith.andi %36, %30 : vector<64x64xi1>
    %38 = vector.broadcast %26 : i32 to vector<64x64xi32>
    %39 = arith.addi %28, %38 : vector<64x64xi32>
    %40 = arith.select %37, %39, %28 : vector<64x64xi1>, vector<64x64xi32>
    %41 = arith.cmpi eq, %24, %40 : vector<64x64xi32>
    %42 = arith.extui %41 : vector<64x64xi1> to vector<64x64xi32>
    %43 = arith.sitofp %42 : vector<64x64xi32> to vector<64x64xf32>
    %cst_17 = arith.constant dense<0.000000e+00> : vector<1x64xf32>
    %44 = tpu.matmul %6, %43, %cst_17 {dimension_numbers = #tpu.dot_dimension_numbers<[1], [0], [0], [1], [0, 0, 1, 1], [], []>} : vector<1x64xf32>, vector<64x64xf32>, vector<1x64xf32> -> vector<1x64xf32>
    %45 = arith.mulf %2, %2 : vector<32x64xf32>
    %cst_18 = arith.constant dense<0.000000e+00> : vector<64xf32>
    %46 = vector.multi_reduction <add>, %45, %cst_18 [0] : vector<32x64xf32> to vector<64xf32>
    %47 = vector.shape_cast %46 : vector<64xf32> to vector<1x64xf32>
    %48 = tpu.iota {dimensions = array<i32: 0>} : vector<64x64xi32>
    %49 = tpu.iota {dimensions = array<i32: 1>} : vector<64x64xi32>
    %c4_i32_19 = arith.constant 4 : i32
    %c0_i32_20 = arith.constant 0 : i32
    %50 = arith.cmpi eq, %c4_i32_19, %c0_i32_20 : i32
    %c1_i32_21 = arith.constant 1 : i32
    %51 = arith.select %50, %c1_i32_21, %c4_i32_19 : i32
    %52 = vector.broadcast %51 : i32 to vector<64x64xi32>
    %53 = arith.remsi %48, %52 : vector<64x64xi32>
    %c0_i32_22 = arith.constant 0 : i32
    %54 = vector.broadcast %c0_i32_22 : i32 to vector<64x64xi32>
    %55 = arith.cmpi ne, %53, %54 : vector<64x64xi32>
    %c0_i32_23 = arith.constant 0 : i32
    %56 = vector.broadcast %c0_i32_23 : i32 to vector<64x64xi32>
    %57 = arith.cmpi slt, %53, %56 : vector<64x64xi32>
    %c0_i32_24 = arith.constant 0 : i32
    %58 = arith.cmpi slt, %51, %c0_i32_24 : i32
    %59 = vector.broadcast %58 : i1 to vector<64x64xi1>
    %60 = vector.broadcast %59 : vector<64x64xi1> to vector<64x64xi1>
    %61 = arith.xori %57, %60 : vector<64x64xi1>
    %62 = arith.andi %61, %55 : vector<64x64xi1>
    %63 = vector.broadcast %51 : i32 to vector<64x64xi32>
    %64 = arith.addi %53, %63 : vector<64x64xi32>
    %65 = arith.select %62, %64, %53 : vector<64x64xi1>, vector<64x64xi32>
    %c4_i32_25 = arith.constant 4 : i32
    %c0_i32_26 = arith.constant 0 : i32
    %66 = arith.cmpi eq, %c4_i32_25, %c0_i32_26 : i32
    %c1_i32_27 = arith.constant 1 : i32
    %67 = arith.select %66, %c1_i32_27, %c4_i32_25 : i32
    %68 = vector.broadcast %67 : i32 to vector<64x64xi32>
    %69 = arith.remsi %49, %68 : vector<64x64xi32>
    %c0_i32_28 = arith.constant 0 : i32
    %70 = vector.broadcast %c0_i32_28 : i32 to vector<64x64xi32>
    %71 = arith.cmpi ne, %69, %70 : vector<64x64xi32>
    %c0_i32_29 = arith.constant 0 : i32
    %72 = vector.broadcast %c0_i32_29 : i32 to vector<64x64xi32>
    %73 = arith.cmpi slt, %69, %72 : vector<64x64xi32>
    %c0_i32_30 = arith.constant 0 : i32
    %74 = arith.cmpi slt, %67, %c0_i32_30 : i32
    %75 = vector.broadcast %74 : i1 to vector<64x64xi1>
    %76 = vector.broadcast %75 : vector<64x64xi1> to vector<64x64xi1>
    %77 = arith.xori %73, %76 : vector<64x64xi1>
    %78 = arith.andi %77, %71 : vector<64x64xi1>
    %79 = vector.broadcast %67 : i32 to vector<64x64xi32>
    %80 = arith.addi %69, %79 : vector<64x64xi32>
    %81 = arith.select %78, %80, %69 : vector<64x64xi1>, vector<64x64xi32>
    %82 = arith.cmpi eq, %65, %81 : vector<64x64xi32>
    %83 = arith.extui %82 : vector<64x64xi1> to vector<64x64xi32>
    %84 = arith.sitofp %83 : vector<64x64xi32> to vector<64x64xf32>
    %cst_31 = arith.constant dense<0.000000e+00> : vector<1x64xf32>
    %85 = tpu.matmul %47, %84, %cst_31 {dimension_numbers = #tpu.dot_dimension_numbers<[1], [0], [0], [1], [0, 0, 1, 1], [], []>} : vector<1x64xf32>, vector<64x64xf32>, vector<1x64xf32> -> vector<1x64xf32>
    %cst_32 = arith.constant 5.120000e+02 : f32
    %86 = vector.broadcast %cst_32 : f32 to vector<1x64xf32>
    %87 = arith.divf %44, %86 : vector<1x64xf32>
    %cst_33 = arith.constant 5.120000e+02 : f32
    %88 = vector.broadcast %cst_33 : f32 to vector<1x64xf32>
    %89 = arith.divf %85, %88 : vector<1x64xf32>
    %90 = arith.mulf %87, %87 : vector<1x64xf32>
    %91 = arith.subf %89, %90 : vector<1x64xf32>
    %cst_34 = arith.constant 9.99999974E-6 : f32
    %92 = vector.broadcast %cst_34 : f32 to vector<1x64xf32>
    %93 = arith.addf %91, %92 : vector<1x64xf32>
    %94 = math.rsqrt %93 : vector<1x64xf32>
    %95 = arith.mulf %3, %94 : vector<1x64xf32>
    %96 = arith.mulf %87, %95 : vector<1x64xf32>
    %97 = arith.subf %4, %96 : vector<1x64xf32>
    %98 = vector.broadcast %95 : vector<1x64xf32> to vector<32x64xf32>
    %99 = arith.mulf %2, %98 : vector<32x64xf32>
    %100 = vector.broadcast %97 : vector<1x64xf32> to vector<32x64xf32>
    %101 = arith.addf %99, %100 : vector<32x64xf32>
    %cst_35 = arith.constant 0.000000e+00 : f32
    %102 = vector.broadcast %cst_35 : f32 to vector<32x64xf32>
    %103 = arith.maximumf %101, %102 : vector<32x64xf32>
    %104 = tpu.iota {dimensions = array<i32: 0>} : vector<32x1xi32>
    %c16_i32 = arith.constant 16 : i32
    %c0_i32_36 = arith.constant 0 : i32
    %105 = arith.cmpi eq, %c16_i32, %c0_i32_36 : i32
    %c1_i32_37 = arith.constant 1 : i32
    %106 = arith.select %105, %c1_i32_37, %c16_i32 : i32
    %107 = vector.broadcast %106 : i32 to vector<32x1xi32>
    %108 = arith.remsi %104, %107 : vector<32x1xi32>
    %c0_i32_38 = arith.constant 0 : i32
    %109 = vector.broadcast %c0_i32_38 : i32 to vector<32x1xi32>
    %110 = arith.cmpi ne, %108, %109 : vector<32x1xi32>
    %c0_i32_39 = arith.constant 0 : i32
    %111 = vector.broadcast %c0_i32_39 : i32 to vector<32x1xi32>
    %112 = arith.cmpi slt, %108, %111 : vector<32x1xi32>
    %c0_i32_40 = arith.constant 0 : i32
    %113 = arith.cmpi slt, %106, %c0_i32_40 : i32
    %114 = vector.broadcast %113 : i1 to vector<32x1xi1>
    %115 = vector.broadcast %114 : vector<32x1xi1> to vector<32x1xi1>
    %116 = arith.xori %112, %115 : vector<32x1xi1>
    %117 = arith.andi %116, %110 : vector<32x1xi1>
    %118 = vector.broadcast %106 : i32 to vector<32x1xi32>
    %119 = arith.addi %108, %118 : vector<32x1xi32>
    %120 = arith.select %117, %119, %108 : vector<32x1xi1>, vector<32x1xi32>
    %c15_i32 = arith.constant 15 : i32
    %121 = vector.broadcast %c15_i32 : i32 to vector<32x1xi32>
    %122 = arith.cmpi eq, %120, %121 : vector<32x1xi32>
    %c31_i32 = arith.constant 31 : i32
    %123 = tpu.dynamic_rotate %103 by %c31_i32 dim 0 : vector<32x64xf32>, i32 -> vector<32x64xf32>
    %cst_41 = arith.constant 0.000000e+00 : f32
    %124 = vector.shape_cast %122 : vector<32x1xi1> to vector<32x1xi1>
    %125 = vector.broadcast %124 : vector<32x1xi1> to vector<32x64xi1>
    %126 = vector.broadcast %cst_41 : f32 to vector<32x64xf32>
    %127 = arith.select %125, %126, %123 : vector<32x64xi1>, vector<32x64xf32>
    %c0_42 = arith.constant 0 : index
    %c0_43 = arith.constant 0 : index
    %128 = vector.load %arg2[%c0_42, %c0_43] : memref<64x256xf32, #tpu.memory_space<vmem>>, vector<64x256xf32>
    %cst_44 = arith.constant dense<0.000000e+00> : vector<32x256xf32>
    %129 = tpu.matmul %103, %128, %cst_44 {dimension_numbers = #tpu.dot_dimension_numbers<[1], [0], [0], [1], [0, 0, 1, 1], [], []>} : vector<32x64xf32>, vector<64x256xf32>, vector<32x256xf32> -> vector<32x256xf32>
    %c0_45 = arith.constant 0 : index
    %c0_46 = arith.constant 0 : index
    %130 = vector.load %arg3[%c0_45, %c0_46] : memref<64x256xf32, #tpu.memory_space<vmem>>, vector<64x256xf32>
    %cst_47 = arith.constant dense<0.000000e+00> : vector<32x256xf32>
    %131 = tpu.matmul %127, %130, %cst_47 {dimension_numbers = #tpu.dot_dimension_numbers<[1], [0], [0], [1], [0, 0, 1, 1], [], []>} : vector<32x64xf32>, vector<64x256xf32>, vector<32x256xf32> -> vector<32x256xf32>
    %132 = arith.addf %129, %131 : vector<32x256xf32>
    %c0_48 = arith.constant 0 : index
    %c0_49 = arith.constant 0 : index
    %133 = vector.load %arg7[%c0_48, %c0_49] : memref<1x256xf32, #tpu.memory_space<vmem>>, vector<1x256xf32>
    %c0_50 = arith.constant 0 : index
    %c0_51 = arith.constant 0 : index
    %134 = vector.load %arg8[%c0_50, %c0_51] : memref<1x256xf32, #tpu.memory_space<vmem>>, vector<1x256xf32>
    %cst_52 = arith.constant dense<0.000000e+00> : vector<256xf32>
    %135 = vector.multi_reduction <add>, %132, %cst_52 [0] : vector<32x256xf32> to vector<256xf32>
    %136 = vector.shape_cast %135 : vector<256xf32> to vector<1x256xf32>
    %c4_i32_53 = arith.constant 4 : i32
    %137 = tpu.dynamic_rotate %136 by %c4_i32_53 dim 1 : vector<1x256xf32>, i32 -> vector<1x256xf32>
    %138 = arith.addf %136, %137 : vector<1x256xf32>
    %c8_i32 = arith.constant 8 : i32
    %139 = tpu.dynamic_rotate %138 by %c8_i32 dim 1 : vector<1x256xf32>, i32 -> vector<1x256xf32>
    %140 = arith.addf %138, %139 : vector<1x256xf32>
    %c16_i32_54 = arith.constant 16 : i32
    %141 = tpu.dynamic_rotate %140 by %c16_i32_54 dim 1 : vector<1x256xf32>, i32 -> vector<1x256xf32>
    %142 = arith.addf %140, %141 : vector<1x256xf32>
    %c32_i32 = arith.constant 32 : i32
    %143 = tpu.dynamic_rotate %142 by %c32_i32 dim 1 : vector<1x256xf32>, i32 -> vector<1x256xf32>
    %144 = arith.addf %142, %143 : vector<1x256xf32>
    %c64_i32 = arith.constant 64 : i32
    %145 = tpu.dynamic_rotate %144 by %c64_i32 dim 1 : vector<1x256xf32>, i32 -> vector<1x256xf32>
    %146 = arith.addf %144, %145 : vector<1x256xf32>
    %c128_i32 = arith.constant 128 : i32
    %147 = tpu.dynamic_rotate %146 by %c128_i32 dim 1 : vector<1x256xf32>, i32 -> vector<1x256xf32>
    %148 = arith.addf %146, %147 : vector<1x256xf32>
    %149 = arith.mulf %132, %132 : vector<32x256xf32>
    %cst_55 = arith.constant dense<0.000000e+00> : vector<256xf32>
    %150 = vector.multi_reduction <add>, %149, %cst_55 [0] : vector<32x256xf32> to vector<256xf32>
    %151 = vector.shape_cast %150 : vector<256xf32> to vector<1x256xf32>
    %c4_i32_56 = arith.constant 4 : i32
    %152 = tpu.dynamic_rotate %151 by %c4_i32_56 dim 1 : vector<1x256xf32>, i32 -> vector<1x256xf32>
    %153 = arith.addf %151, %152 : vector<1x256xf32>
    %c8_i32_57 = arith.constant 8 : i32
    %154 = tpu.dynamic_rotate %153 by %c8_i32_57 dim 1 : vector<1x256xf32>, i32 -> vector<1x256xf32>
    %155 = arith.addf %153, %154 : vector<1x256xf32>
    %c16_i32_58 = arith.constant 16 : i32
    %156 = tpu.dynamic_rotate %155 by %c16_i32_58 dim 1 : vector<1x256xf32>, i32 -> vector<1x256xf32>
    %157 = arith.addf %155, %156 : vector<1x256xf32>
    %c32_i32_59 = arith.constant 32 : i32
    %158 = tpu.dynamic_rotate %157 by %c32_i32_59 dim 1 : vector<1x256xf32>, i32 -> vector<1x256xf32>
    %159 = arith.addf %157, %158 : vector<1x256xf32>
    %c64_i32_60 = arith.constant 64 : i32
    %160 = tpu.dynamic_rotate %159 by %c64_i32_60 dim 1 : vector<1x256xf32>, i32 -> vector<1x256xf32>
    %161 = arith.addf %159, %160 : vector<1x256xf32>
    %c128_i32_61 = arith.constant 128 : i32
    %162 = tpu.dynamic_rotate %161 by %c128_i32_61 dim 1 : vector<1x256xf32>, i32 -> vector<1x256xf32>
    %163 = arith.addf %161, %162 : vector<1x256xf32>
    %cst_62 = arith.constant 2.048000e+03 : f32
    %164 = vector.broadcast %cst_62 : f32 to vector<1x256xf32>
    %165 = arith.divf %148, %164 : vector<1x256xf32>
    %cst_63 = arith.constant 2.048000e+03 : f32
    %166 = vector.broadcast %cst_63 : f32 to vector<1x256xf32>
    %167 = arith.divf %163, %166 : vector<1x256xf32>
    %168 = arith.mulf %165, %165 : vector<1x256xf32>
    %169 = arith.subf %167, %168 : vector<1x256xf32>
    %cst_64 = arith.constant 9.99999974E-6 : f32
    %170 = vector.broadcast %cst_64 : f32 to vector<1x256xf32>
    %171 = arith.addf %169, %170 : vector<1x256xf32>
    %172 = math.rsqrt %171 : vector<1x256xf32>
    %173 = arith.mulf %133, %172 : vector<1x256xf32>
    %174 = arith.mulf %165, %173 : vector<1x256xf32>
    %175 = arith.subf %134, %174 : vector<1x256xf32>
    %176 = vector.broadcast %173 : vector<1x256xf32> to vector<32x256xf32>
    %177 = arith.mulf %132, %176 : vector<32x256xf32>
    %178 = vector.broadcast %175 : vector<1x256xf32> to vector<32x256xf32>
    %179 = arith.addf %177, %178 : vector<32x256xf32>
    %cst_65 = arith.constant 0.000000e+00 : f32
    %180 = vector.broadcast %cst_65 : f32 to vector<32x256xf32>
    %181 = arith.maximumf %179, %180 : vector<32x256xf32>
    %c0_66 = arith.constant 0 : index
    %c0_67 = arith.constant 0 : index
    %182 = vector.load %arg4[%c0_66, %c0_67] : memref<256x512xf32, #tpu.memory_space<vmem>>, vector<256x512xf32>
    %cst_68 = arith.constant dense<0.000000e+00> : vector<32x512xf32>
    %183 = tpu.matmul %181, %182, %cst_68 {dimension_numbers = #tpu.dot_dimension_numbers<[1], [0], [0], [1], [0, 0, 1, 1], [], []>} : vector<32x256xf32>, vector<256x512xf32>, vector<32x512xf32> -> vector<32x512xf32>
    %c0_69 = arith.constant 0 : index
    %c0_70 = arith.constant 0 : index
    %184 = vector.load %arg9[%c0_69, %c0_70] : memref<1x512xf32, #tpu.memory_space<vmem>>, vector<1x512xf32>
    %c0_71 = arith.constant 0 : index
    %c0_72 = arith.constant 0 : index
    %185 = vector.load %arg10[%c0_71, %c0_72] : memref<1x512xf32, #tpu.memory_space<vmem>>, vector<1x512xf32>
    %cst_73 = arith.constant dense<0.000000e+00> : vector<512xf32>
    %186 = vector.multi_reduction <add>, %183, %cst_73 [0] : vector<32x512xf32> to vector<512xf32>
    %187 = vector.shape_cast %186 : vector<512xf32> to vector<1x512xf32>
    %c8_i32_74 = arith.constant 8 : i32
    %188 = tpu.dynamic_rotate %187 by %c8_i32_74 dim 1 : vector<1x512xf32>, i32 -> vector<1x512xf32>
    %189 = arith.addf %187, %188 : vector<1x512xf32>
    %c16_i32_75 = arith.constant 16 : i32
    %190 = tpu.dynamic_rotate %189 by %c16_i32_75 dim 1 : vector<1x512xf32>, i32 -> vector<1x512xf32>
    %191 = arith.addf %189, %190 : vector<1x512xf32>
    %c32_i32_76 = arith.constant 32 : i32
    %192 = tpu.dynamic_rotate %191 by %c32_i32_76 dim 1 : vector<1x512xf32>, i32 -> vector<1x512xf32>
    %193 = arith.addf %191, %192 : vector<1x512xf32>
    %c64_i32_77 = arith.constant 64 : i32
    %194 = tpu.dynamic_rotate %193 by %c64_i32_77 dim 1 : vector<1x512xf32>, i32 -> vector<1x512xf32>
    %195 = arith.addf %193, %194 : vector<1x512xf32>
    %c128_i32_78 = arith.constant 128 : i32
    %196 = tpu.dynamic_rotate %195 by %c128_i32_78 dim 1 : vector<1x512xf32>, i32 -> vector<1x512xf32>
    %197 = arith.addf %195, %196 : vector<1x512xf32>
    %c256_i32 = arith.constant 256 : i32
    %198 = tpu.dynamic_rotate %197 by %c256_i32 dim 1 : vector<1x512xf32>, i32 -> vector<1x512xf32>
    %199 = arith.addf %197, %198 : vector<1x512xf32>
    %200 = arith.mulf %183, %183 : vector<32x512xf32>
    %cst_79 = arith.constant dense<0.000000e+00> : vector<512xf32>
    %201 = vector.multi_reduction <add>, %200, %cst_79 [0] : vector<32x512xf32> to vector<512xf32>
    %202 = vector.shape_cast %201 : vector<512xf32> to vector<1x512xf32>
    %c8_i32_80 = arith.constant 8 : i32
    %203 = tpu.dynamic_rotate %202 by %c8_i32_80 dim 1 : vector<1x512xf32>, i32 -> vector<1x512xf32>
    %204 = arith.addf %202, %203 : vector<1x512xf32>
    %c16_i32_81 = arith.constant 16 : i32
    %205 = tpu.dynamic_rotate %204 by %c16_i32_81 dim 1 : vector<1x512xf32>, i32 -> vector<1x512xf32>
    %206 = arith.addf %204, %205 : vector<1x512xf32>
    %c32_i32_82 = arith.constant 32 : i32
    %207 = tpu.dynamic_rotate %206 by %c32_i32_82 dim 1 : vector<1x512xf32>, i32 -> vector<1x512xf32>
    %208 = arith.addf %206, %207 : vector<1x512xf32>
    %c64_i32_83 = arith.constant 64 : i32
    %209 = tpu.dynamic_rotate %208 by %c64_i32_83 dim 1 : vector<1x512xf32>, i32 -> vector<1x512xf32>
    %210 = arith.addf %208, %209 : vector<1x512xf32>
    %c128_i32_84 = arith.constant 128 : i32
    %211 = tpu.dynamic_rotate %210 by %c128_i32_84 dim 1 : vector<1x512xf32>, i32 -> vector<1x512xf32>
    %212 = arith.addf %210, %211 : vector<1x512xf32>
    %c256_i32_85 = arith.constant 256 : i32
    %213 = tpu.dynamic_rotate %212 by %c256_i32_85 dim 1 : vector<1x512xf32>, i32 -> vector<1x512xf32>
    %214 = arith.addf %212, %213 : vector<1x512xf32>
    %cst_86 = arith.constant 2.048000e+03 : f32
    %215 = vector.broadcast %cst_86 : f32 to vector<1x512xf32>
    %216 = arith.divf %199, %215 : vector<1x512xf32>
    %cst_87 = arith.constant 2.048000e+03 : f32
    %217 = vector.broadcast %cst_87 : f32 to vector<1x512xf32>
    %218 = arith.divf %214, %217 : vector<1x512xf32>
    %219 = arith.mulf %216, %216 : vector<1x512xf32>
    %220 = arith.subf %218, %219 : vector<1x512xf32>
    %cst_88 = arith.constant 9.99999974E-6 : f32
    %221 = vector.broadcast %cst_88 : f32 to vector<1x512xf32>
    %222 = arith.addf %220, %221 : vector<1x512xf32>
    %223 = math.rsqrt %222 : vector<1x512xf32>
    %224 = arith.mulf %184, %223 : vector<1x512xf32>
    %225 = arith.mulf %216, %224 : vector<1x512xf32>
    %226 = arith.subf %185, %225 : vector<1x512xf32>
    %227 = vector.broadcast %224 : vector<1x512xf32> to vector<32x512xf32>
    %228 = arith.mulf %183, %227 : vector<32x512xf32>
    %229 = vector.broadcast %226 : vector<1x512xf32> to vector<32x512xf32>
    %230 = arith.addf %228, %229 : vector<32x512xf32>
    %cst_89 = arith.constant 0.000000e+00 : f32
    %231 = vector.broadcast %cst_89 : f32 to vector<32x512xf32>
    %232 = arith.maximumf %230, %231 : vector<32x512xf32>
    %c0_90 = arith.constant 0 : index
    %c0_91 = arith.constant 0 : index
    %233 = vector.load %arg11[%c0_90, %c0_91] : memref<32x512xf32, #tpu.memory_space<vmem>>, vector<32x512xf32>
    tpu.vector_store %arg11[%c0_90, %c0_91], %232 {strides = array<i32>} : memref<32x512xf32, #tpu.memory_space<vmem>>, vector<32x512xf32>,
    return
  }
}

</mosaic_0001>

<llo_original>
// kernel: tpu_custom_call.1
$region0: #{tpu_custom_call.1}
  #allocation0 [shape = 'u32[]', space=smem, size = 0x4, offset = 0x4, fixed_abs, tag = 'smem constant byte address 0x4 - core index']
  #allocation1 [shape = 'u32[144,128]{1,0:T(1,128)}', space=vmem, size = 0x12000, scoped, tag = 'internal scratch']
  %s0 = inlined_call_operand.vmem [shape: f32[32,256], index: 0, kind: input, shape index: {}]
  %s1 = inlined_call_operand.vmem [shape: f32[256,64], index: 1, kind: input, shape index: {}]
  %s2 = inlined_call_operand.vmem [shape: f32[64,256], index: 2, kind: input, shape index: {}]
  %s3 = inlined_call_operand.vmem [shape: f32[64,256], index: 3, kind: input, shape index: {}]
  %s4 = inlined_call_operand.hbm [shape: f32[256,512], index: 4, kind: input, shape index: {}]
  %s5 = inlined_call_operand.vmem [shape: f32[1,64], index: 5, kind: input, shape index: {}]
  %s6 = inlined_call_operand.vmem [shape: f32[1,64], index: 6, kind: input, shape index: {}]
  %s7 = inlined_call_operand.vmem [shape: f32[1,256], index: 7, kind: input, shape index: {}]
  %s8 = inlined_call_operand.vmem [shape: f32[1,256], index: 8, kind: input, shape index: {}]
  %s9 = inlined_call_operand.vmem [shape: f32[1,512], index: 9, kind: input, shape index: {}]
  %s10 = inlined_call_operand.vmem [shape: f32[1,512], index: 10, kind: input, shape index: {}]
  %s11 = inlined_call_operand.hbm [shape: f32[32,512], index: 11, kind: output, shape index: {}]
  %s12 = sld [smem:[#allocation0]]
  $region58: #{tpu_custom_call.1} parent=0
    _
  %s14 = ssub.s32 1, %s12
  %s15 = scalar_select 0, %s14, %s12
  $region1: #{tpu_custom_call.1} parent=0
    #allocation2 [shape = 'u8[524288]{0}', space=vmem, size = 0x80000, scoped, tag = 'input window, operand 4, single buffered']
    #allocation3 [shape = 's32[1]{0}', space=sflag, size = 0x4, scoped, tag = 'scoped memory for tpu_custom_call.1']
    #allocation4 [shape = 's32[1]{0}', space=sflag, size = 0x4, scoped, tag = 'scoped memory for tpu_custom_call.1']
    #allocation5 [shape = 'u8[65536]{0}', space=vmem, size = 0x10000, scoped, tag = 'output window, operand 0, single buffered']
    %16 = vsyncpa [#allocation3], 0
    %17 = vsyncpa [#allocation4], 0
    // Predicated region
    $region2: #{tpu_custom_call.1} parent=1 // pred_check
      _
    $region3: #{tpu_custom_call.1} parent=1 // pred_check_branch
      %19 = sbr.rel (0) target = $region5
    $region4: #{tpu_custom_call.1} parent=1 // pred_region
      _
    $region5: #{tpu_custom_call.1} parent=1 // pred_fallthru
      _
    // Predicated region
    $region6: #{tpu_custom_call.1} parent=1 // pred_check
      _
    $region7: #{tpu_custom_call.1} parent=1 // pred_check_branch
      %21 = sbr.rel (0) target = $region9
    $region8: #{tpu_custom_call.1} parent=1 // pred_region
      _
    $region9: #{tpu_custom_call.1} parent=1 // pred_fallthru
      _
    // Predicated region
    $region10: #{tpu_custom_call.1} parent=1 // pred_check
      _
    $region11: #{tpu_custom_call.1} parent=1 // pred_check_branch
      %23 = sbr.rel (0) target = $region13
    $region12: #{tpu_custom_call.1} parent=1 // pred_region
      _
    $region13: #{tpu_custom_call.1} parent=1 // pred_fallthru
      _
    // Predicated region
    $region14: #{tpu_custom_call.1} parent=1 // pred_check
      _
    $region15: #{tpu_custom_call.1} parent=1 // pred_check_branch
      %25 = sbr.rel (0) target = $region17
    $region16: #{tpu_custom_call.1} parent=1 // pred_region
      _
    $region17: #{tpu_custom_call.1} parent=1 // pred_fallthru
      _
    // Predicated region
    $region18: #{tpu_custom_call.1} parent=1 // pred_check
      _
    $region19: #{tpu_custom_call.1} parent=1 // pred_check_branch
      %27 = sbr.rel (0) target = $region21
    $region20: #{tpu_custom_call.1} parent=1 // pred_region
      %s29 = ssub.s32 16384, 16384
      %30 = vsyncadd [#allocation3], %s29
      %s31 = sshll.u32 [#allocation2], 4
      %s32 = int_to_ptr.vmem [resolvable:$true] %s31
      %37 = dma.hbm_to_vmem [thread:$0]  %s4, 16384, %s32, [#allocation3], 512, 512, 32
    $region21: #{tpu_custom_call.1} parent=1 // pred_fallthru
      _
    // Predicated region
    $region22: #{tpu_custom_call.1} parent=1 // pred_check
      _
    $region23: #{tpu_custom_call.1} parent=1 // pred_check_branch
      %39 = sbr.rel (0) target = $region25
    $region24: #{tpu_custom_call.1} parent=1 // pred_region
      _
    $region25: #{tpu_custom_call.1} parent=1 // pred_fallthru
      _
    // Predicated region
    $region26: #{tpu_custom_call.1} parent=1 // pred_check
      _
    $region27: #{tpu_custom_call.1} parent=1 // pred_check_branch
      %41 = sbr.rel (0) target = $region29
    $region28: #{tpu_custom_call.1} parent=1 // pred_region
      _
    $region29: #{tpu_custom_call.1} parent=1 // pred_fallthru
      _
    // Predicated region
    $region30: #{tpu_custom_call.1} parent=1 // pred_check
      _
    $region31: #{tpu_custom_call.1} parent=1 // pred_check_branch
      %43 = sbr.rel (0) target = $region33
    $region32: #{tpu_custom_call.1} parent=1 // pred_region
      _
    $region33: #{tpu_custom_call.1} parent=1 // pred_fallthru
      _
    // Predicated region
    $region34: #{tpu_custom_call.1} parent=1 // pred_check
      _
    $region35: #{tpu_custom_call.1} parent=1 // pred_check_branch
      %45 = sbr.rel (0) target = $region37
    $region36: #{tpu_custom_call.1} parent=1 // pred_region
      _
    $region37: #{tpu_custom_call.1} parent=1 // pred_fallthru
      _
    // Predicated region
    $region38: #{tpu_custom_call.1} parent=1 // pred_check
      _
    $region39: #{tpu_custom_call.1} parent=1 // pred_check_branch
      %47 = sbr.rel (0) target = $region41
    $region40: #{tpu_custom_call.1} parent=1 // pred_region
      _
    $region41: #{tpu_custom_call.1} parent=1 // pred_fallthru
      _
    // Predicated region
    $region42: #{tpu_custom_call.1} parent=1 // pred_check
      _
    $region43: #{tpu_custom_call.1} parent=1 // pred_check_branch
      %49 = sbr.rel (0) target = $region45
    $region44: #{tpu_custom_call.1} parent=1 // pred_region
      _
    $region45: #{tpu_custom_call.1} parent=1 // pred_fallthru
      _
    // Predicated region
    $region46: #{tpu_custom_call.1} parent=1 // pred_check
      _
    $region47: #{tpu_custom_call.1} parent=1 // pred_check_branch
      %51 = sbr.rel (0) target = $region49
    $region48: #{tpu_custom_call.1} parent=1 // pred_region
      %52 = dma.done [#allocation3], 16384
    $region49: #{tpu_custom_call.1} parent=1 // pred_fallthru
      _
    %v53 = vld [vmem:[%s0] sm:$0xff]
    %v54 = vld [vmem:[%s0 + $0x8] sm:$0xff]
    %v55 = vld [vmem:[%s0 + $0x10] sm:$0xff]
    %v56 = vld [vmem:[%s0 + $0x18] sm:$0xff]
    %v57 = vld [vmem:[%s0 + $0x20] sm:$0xff]
    %v58 = vld [vmem:[%s0 + $0x28] sm:$0xff]
    %v59 = vld [vmem:[%s0 + $0x30] sm:$0xff]
    %v60 = vld [vmem:[%s0 + $0x38] sm:$0xff]
    %v61 = vld [vmem:[%s1] sm:$0xff]
    %v62 = vld [vmem:[%s1 + $0x8] sm:$0xff]
    %v63 = vld [vmem:[%s1 + $0x10] sm:$0xff]
    %v64 = vld [vmem:[%s1 + $0x18] sm:$0xff]
    %v65 = vld [vmem:[%s1 + $0x20] sm:$0xff]
    %v66 = vld [vmem:[%s1 + $0x28] sm:$0xff]
    %v67 = vld [vmem:[%s1 + $0x30] sm:$0xff]
    %v68 = vld [vmem:[%s1 + $0x38] sm:$0xff]
    %v69 = vld [vmem:[%s1 + $0x40] sm:$0xff]
    %v70 = vld [vmem:[%s1 + $0x48] sm:$0xff]
    %v71 = vld [vmem:[%s1 + $0x50] sm:$0xff]
    %v72 = vld [vmem:[%s1 + $0x58] sm:$0xff]
    %v73 = vld [vmem:[%s1 + $0x60] sm:$0xff]
    %v74 = vld [vmem:[%s1 + $0x68] sm:$0xff]
    %v75 = vld [vmem:[%s1 + $0x70] sm:$0xff]
    %v76 = vld [vmem:[%s1 + $0x78] sm:$0xff]
    %v77 = vld [vmem:[%s1 + $0x80] sm:$0xff]
    %v78 = vld [vmem:[%s1 + $0x88] sm:$0xff]
    %v79 = vld [vmem:[%s1 + $0x90] sm:$0xff]
    %v80 = vld [vmem:[%s1 + $0x98] sm:$0xff]
    %v81 = vld [vmem:[%s1 + $0xa0] sm:$0xff]
    %v82 = vld [vmem:[%s1 + $0xa8] sm:$0xff]
    %v83 = vld [vmem:[%s1 + $0xb0] sm:$0xff]
    %v84 = vld [vmem:[%s1 + $0xb8] sm:$0xff]
    %v85 = vld [vmem:[%s1 + $0xc0] sm:$0xff]
    %v86 = vld [vmem:[%s1 + $0xc8] sm:$0xff]
    %v87 = vld [vmem:[%s1 + $0xd0] sm:$0xff]
    %v88 = vld [vmem:[%s1 + $0xd8] sm:$0xff]
    %v89 = vld [vmem:[%s1 + $0xe0] sm:$0xff]
    %v90 = vld [vmem:[%s1 + $0xe8] sm:$0xff]
    %v91 = vld [vmem:[%s1 + $0xf0] sm:$0xff]
    %v92 = vld [vmem:[%s1 + $0xf8] sm:$0xff]
    %93 = vmatprep.subr.mxu0 0.0
    %94 = vmatpush1.msra.mxu0 %v76
    %95 = vmatprep.subr.mxu0 0.0
    %96 = vmatpush1.msra.mxu0 %v75
    %97 = vmatprep.subr.mxu0 0.0
    %98 = vmatpush1.msra.mxu0 %v74
    %99 = vmatprep.subr.mxu0 0.0
    %100 = vmatpush1.msra.mxu0 %v73
    %101 = vmatprep.subr.mxu0 0.0
    %102 = vmatpush1.msra.mxu0 %v72
    %103 = vmatprep.subr.mxu0 0.0
    %104 = vmatpush1.msra.mxu0 %v71
    %105 = vmatprep.subr.mxu0 0.0
    %106 = vmatpush1.msra.mxu0 %v70
    %107 = vmatprep.subr.mxu0 0.0
    %108 = vmatpush1.msra.mxu0 %v69
    %109 = vmatprep.subr.mxu0 0.0
    %110 = vmatpush1.msra.mxu0 %v68
    %111 = vmatprep.subr.mxu0 0.0
    %112 = vmatpush1.msra.mxu0 %v67
    %113 = vmatprep.subr.mxu0 0.0
    %114 = vmatpush1.msra.mxu0 %v66
    %115 = vmatprep.subr.mxu0 0.0
    %116 = vmatpush1.msra.mxu0 %v65
    %117 = vmatprep.subr.mxu0 0.0
    %118 = vmatpush1.msra.mxu0 %v64
    %119 = vmatprep.subr.mxu0 0.0
    %120 = vmatpush1.msra.mxu0 %v63
    %121 = vmatprep.subr.mxu0 0.0
    %122 = vmatpush1.msra.mxu0 %v62
    %123 = vmatprep.subr.mxu0 0.0
    %124 = vmatpush1.msra.mxu0 %v61
    %125 = vmatprep.subr.mxu0 0.0
    %126 = vmatpush2.msra.mxu0 %v92
    %127 = vmatprep.subr.mxu0 0.0
    %128 = vmatpush2.msra.mxu0 %v91
    %129 = vmatprep.subr.mxu0 0.0
    %130 = vmatpush2.msra.mxu0 %v90
    %131 = vmatprep.subr.mxu0 0.0
    %132 = vmatpush2.msra.mxu0 %v89
    %133 = vmatprep.subr.mxu0 0.0
    %134 = vmatpush2.msra.mxu0 %v88
    %135 = vmatprep.subr.mxu0 0.0
    %136 = vmatpush2.msra.mxu0 %v87
    %137 = vmatprep.subr.mxu0 0.0
    %138 = vmatpush2.msra.mxu0 %v86
    %139 = vmatprep.subr.mxu0 0.0
    %140 = vmatpush2.msra.mxu0 %v85
    %141 = vmatprep.subr.mxu0 0.0
    %142 = vmatpush2.msra.mxu0 %v84
    %143 = vmatprep.subr.mxu0 0.0
    %144 = vmatpush2.msra.mxu0 %v83
    %145 = vmatprep.subr.mxu0 0.0
    %146 = vmatpush2.msra.mxu0 %v82
    %147 = vmatprep.subr.mxu0 0.0
    %148 = vmatpush2.msra.mxu0 %v81
    %149 = vmatprep.subr.mxu0 0.0
    %150 = vmatpush2.msra.mxu0 %v80
    %151 = vmatprep.subr.mxu0 0.0
    %152 = vmatpush2.msra.mxu0 %v79
    %153 = vmatprep.subr.mxu0 0.0
    %154 = vmatpush2.msra.mxu0 %v78
    %155 = vmatprep.subr.mxu0 0.0
    %156 = vmatpush2.msra.mxu0 %v77
    %157 = vmatprep.mubr.f32.mxu0 %v54
    %158 = vmatmul.mubr.f32.gmra.mxu0 %v53
    %v159 = vpop.f32.mrf.mxu0
    %v160 = vadd.f32 0.0, %v159
    %v161 = vpop.f32.mrf.mxu0
    %162 = vmatprep.mubr.f32.mxu0 %v56
    %163 = vmatmul.mubr.f32.gmra.mxu0 %v55
    %v164 = vpop.f32.mrf.mxu0
    %v165 = vadd.f32 0.0, %v164
    %v166 = vpop.f32.mrf.mxu0
    %167 = vmatprep.mubr.f32.mxu0 %v58
    %168 = vmatmul.mubr.f32.gmra.mxu0 %v57
    %v169 = vpop.f32.mrf.mxu0
    %v170 = vadd.f32 0.0, %v169
    %v171 = vpop.f32.mrf.mxu0
    %172 = vmatprep.mubr.f32.mxu0 %v60
    %173 = vmatmul.mubr.f32.gmra.mxu0 %v59
    %v174 = vpop.f32.mrf.mxu0
    %v175 = vadd.f32 0.0, %v174
    %v176 = vpop.f32.mrf.mxu0
    %177 = vdwg.mxu0
    %v178 = vld [vmem:[%s5] sm:$0x1]
    %v179 = vld [vmem:[%s6] sm:$0x1]
    %vm180 = vcmask 523264
    %v181 = vsel %vm180, %v160, 0.0
    %v182 = vsel %vm180, %v165, 0.0
    %v183 = vadd.f32 %v181, %v182
    %v184 = vsel %vm180, %v170, 0.0
    %v185 = vadd.f32 %v183, %v184
    %v186 = vsel %vm180, %v175, 0.0
    %v187 = vadd.f32 %v185, %v186
    %v188 = vrot.slane %v187, 4
    %v189 = vadd.f32 %v187, %v188
    %v190 = vrot.slane %v189, 2
    %v191 = vadd.f32 %v189, %v190
    %v192 = vrot.slane %v191, 1
    %v193 = vadd.f32 %v191, %v192
    %v194 = vlaneseq
    %v195 = vshrl.u32 %v194, 7
    %v196 = vadd.s32 %v195, 8
    %v197 = vadd.s32 %v195, 16
    %v198 = vadd.s32 %v195, 24
    %v199 = vadd.s32 %v195, 32
    %v200 = vadd.s32 %v195, 40
    %v201 = vadd.s32 %v195, 48
    %v202 = vadd.s32 %v195, 56
    %v203 = vlaneseq
    %v204 = vand.u32 %v203, 127
    %vm205 = vcmp.lt.s32.totalorder %v195, 0
    %v206 = vsub.s32 0, %v195
    %v207 = vsel %vm205, %v206, %v195
    %v208 = vshrl.u32 %v207, 2
    %v209 = vand.u32 %v207, 3
    %v210 = vsub.s32 0, %v209
    %v211 = vsel %vm205, %v210, %v209
    %vm212 = vcmp.lt.s32.totalorder %v196, 0
    %v213 = vsub.s32 0, %v196
    %v214 = vsel %vm212, %v213, %v196
    %v215 = vshrl.u32 %v214, 2
    %v216 = vand.u32 %v214, 3
    %v217 = vsub.s32 0, %v216
    %v218 = vsel %vm212, %v217, %v216
    %vm219 = vcmp.lt.s32.totalorder %v197, 0
    %v220 = vsub.s32 0, %v197
    %v221 = vsel %vm219, %v220, %v197
    %v222 = vshrl.u32 %v221, 2
    %v223 = vand.u32 %v221, 3
    %v224 = vsub.s32 0, %v223
    %v225 = vsel %vm219, %v224, %v223
    %vm226 = vcmp.lt.s32.totalorder %v198, 0
    %v227 = vsub.s32 0, %v198
    %v228 = vsel %vm226, %v227, %v198
    %v229 = vshrl.u32 %v228, 2
    %v230 = vand.u32 %v228, 3
    %v231 = vsub.s32 0, %v230
    %v232 = vsel %vm226, %v231, %v230
    %vm233 = vcmp.lt.s32.totalorder %v199, 0
    %v234 = vsub.s32 0, %v199
    %v235 = vsel %vm233, %v234, %v199
    %v236 = vshrl.u32 %v235, 2
    %v237 = vand.u32 %v235, 3
    %v238 = vsub.s32 0, %v237
    %v239 = vsel %vm233, %v238, %v237
    %vm240 = vcmp.lt.s32.totalorder %v200, 0
    %v241 = vsub.s32 0, %v200
    %v242 = vsel %vm240, %v241, %v200
    %v243 = vshrl.u32 %v242, 2
    %v244 = vand.u32 %v242, 3
    %v245 = vsub.s32 0, %v244
    %v246 = vsel %vm240, %v245, %v244
    %vm247 = vcmp.lt.s32.totalorder %v201, 0
    %v248 = vsub.s32 0, %v201
    %v249 = vsel %vm247, %v248, %v201
    %v250 = vshrl.u32 %v249, 2
    %v251 = vand.u32 %v249, 3
    %v252 = vsub.s32 0, %v251
    %v253 = vsel %vm247, %v252, %v251
    %vm254 = vcmp.lt.s32.totalorder %v202, 0
    %v255 = vsub.s32 0, %v202
    %v256 = vsel %vm254, %v255, %v202
    %v257 = vshrl.u32 %v256, 2
    %v258 = vand.u32 %v256, 3
    %v259 = vsub.s32 0, %v258
    %v260 = vsel %vm254, %v259, %v258
    %vm261 = vcmp.ne.s32.totalorder %v211, 0
    %vm262 = vcmp.ne.s32.totalorder %v218, 0
    %vm263 = vcmp.ne.s32.totalorder %v225, 0
    %vm264 = vcmp.ne.s32.totalorder %v232, 0
    %vm265 = vcmp.ne.s32.totalorder %v239, 0
    %vm266 = vcmp.ne.s32.totalorder %v246, 0
    %vm267 = vcmp.ne.s32.totalorder %v253, 0
    %vm268 = vcmp.ne.s32.totalorder %v260, 0
    %vm269 = vcmp.lt.s32.totalorder %v211, 0
    %vm270 = vcmp.lt.s32.totalorder %v218, 0
    %vm271 = vcmp.lt.s32.totalorder %v225, 0
    %vm272 = vcmp.lt.s32.totalorder %v232, 0
    %vm273 = vcmp.lt.s32.totalorder %v239, 0
    %vm274 = vcmp.lt.s32.totalorder %v246, 0
    %vm275 = vcmp.lt.s32.totalorder %v253, 0
    %vm276 = vcmp.lt.s32.totalorder %v260, 0
    %vm277 = vmand %vm269, %vm261
    %vm278 = vmand %vm270, %vm262
    %vm279 = vmand %vm271, %vm263
    %vm280 = vmand %vm272, %vm264
    %vm281 = vmand %vm273, %vm265
    %vm282 = vmand %vm274, %vm266
    %vm283 = vmand %vm275, %vm267
    %vm284 = vmand %vm276, %vm268
    %v285 = vadd.s32 %v211, 4
    %v286 = vadd.s32 %v218, 4
    %v287 = vadd.s32 %v225, 4
    %v288 = vadd.s32 %v232, 4
    %v289 = vadd.s32 %v239, 4
    %v290 = vadd.s32 %v246, 4
    %v291 = vadd.s32 %v253, 4
    %v292 = vadd.s32 %v260, 4
    %v293 = vsel %vm277, %v285, %v211
    %v294 = vsel %vm278, %v286, %v218
    %v295 = vsel %vm279, %v287, %v225
    %v296 = vsel %vm280, %v288, %v232
    %v297 = vsel %vm281, %v289, %v239
    %v298 = vsel %vm282, %v290, %v246
    %v299 = vsel %vm283, %v291, %v253
    %v300 = vsel %vm284, %v292, %v260
    %vm301 = vcmp.lt.s32.totalorder %v204, 0
    %v302 = vsub.s32 0, %v204
    %v303 = vsel %vm301, %v302, %v204
    %v304 = vshrl.u32 %v303, 2
    %v305 = vand.u32 %v303, 3
    %v306 = vsub.s32 0, %v305
    %v307 = vsel %vm301, %v306, %v305
    %vm308 = vcmp.ne.s32.totalorder %v307, 0
    %vm309 = vcmp.lt.s32.totalorder %v307, 0
    %vm310 = vmand %vm309, %vm308
    %v311 = vadd.s32 %v307, 4
    %v312 = vsel %vm310, %v311, %v307
    %vm313 = vcmp.eq.s32.totalorder %v293, %v312
    %vm314 = vcmp.eq.s32.totalorder %v294, %v312
    %vm315 = vcmp.eq.s32.totalorder %v295, %v312
    %vm316 = vcmp.eq.s32.totalorder %v296, %v312
    %vm317 = vcmp.eq.s32.totalorder %v297, %v312
    %vm318 = vcmp.eq.s32.totalorder %v298, %v312
    %vm319 = vcmp.eq.s32.totalorder %v299, %v312
    %vm320 = vcmp.eq.s32.totalorder %v300, %v312
    %v321 = vsel %vm313, 1, 0
    %v322 = vsel %vm314, 1, 0
    %v323 = vsel %vm315, 1, 0
    %v324 = vsel %vm316, 1, 0
    %v325 = vsel %vm317, 1, 0
    %v326 = vsel %vm318, 1, 0
    %v327 = vsel %vm319, 1, 0
    %v328 = vsel %vm320, 1, 0
    %v329 = vcvt.s32.f32 %v321
    %v330 = vcvt.s32.f32 %v322
    %v331 = vcvt.s32.f32 %v323
    %v332 = vcvt.s32.f32 %v324
    %v333 = vcvt.s32.f32 %v325
    %v334 = vcvt.s32.f32 %v326
    %v335 = vcvt.s32.f32 %v327
    %v336 = vcvt.s32.f32 %v328
    %v338 = vsel %vm180, %v193, 0
    %340 = vmatprep.subr.mxu0 0.0
    %341 = vmatpush1.msra.mxu0 0.0
    %342 = vmatprep.subr.mxu0 0.0
    %343 = vmatpush1.msra.mxu0 0.0
    %344 = vmatprep.subr.mxu0 0.0
    %345 = vmatpush1.msra.mxu0 0.0
    %346 = vmatprep.subr.mxu0 0.0
    %347 = vmatpush1.msra.mxu0 0.0
    %348 = vmatprep.subr.mxu0 0.0
    %349 = vmatpush1.msra.mxu0 0.0
    %350 = vmatprep.subr.mxu0 0.0
    %351 = vmatpush1.msra.mxu0 0.0
    %352 = vmatprep.subr.mxu0 0.0
    %353 = vmatpush1.msra.mxu0 0.0
    %354 = vmatprep.subr.mxu0 0.0
    %355 = vmatpush1.msra.mxu0 0.0
    %356 = vmatprep.subr.mxu0 0.0
    %357 = vmatpush1.msra.mxu0 %v336
    %358 = vmatprep.subr.mxu0 0.0
    %359 = vmatpush1.msra.mxu0 %v335
    %360 = vmatprep.subr.mxu0 0.0
    %361 = vmatpush1.msra.mxu0 %v334
    %362 = vmatprep.subr.mxu0 0.0
    %363 = vmatpush1.msra.mxu0 %v333
    %364 = vmatprep.subr.mxu0 0.0
    %365 = vmatpush1.msra.mxu0 %v332
    %366 = vmatprep.subr.mxu0 0.0
    %367 = vmatpush1.msra.mxu0 %v331
    %368 = vmatprep.subr.mxu0 0.0
    %369 = vmatpush1.msra.mxu0 %v330
    %370 = vmatprep.subr.mxu0 0.0
    %371 = vmatpush1.msra.mxu0 %v329
    %372 = vmatprep.subr.mxu0 0.0
    %373 = vmatpush2.msra.mxu0 0.0
    %374 = vmatprep.subr.mxu0 0.0
    %375 = vmatpush2.msra.mxu0 0.0
    %376 = vmatprep.subr.mxu0 0.0
    %377 = vmatpush2.msra.mxu0 0.0
    %378 = vmatprep.subr.mxu0 0.0
    %379 = vmatpush2.msra.mxu0 0.0
    %380 = vmatprep.subr.mxu0 0.0
    %381 = vmatpush2.msra.mxu0 0.0
    %382 = vmatprep.subr.mxu0 0.0
    %383 = vmatpush2.msra.mxu0 0.0
    %384 = vmatprep.subr.mxu0 0.0
    %385 = vmatpush2.msra.mxu0 0.0
    %386 = vmatprep.subr.mxu0 0.0
    %387 = vmatpush2.msra.mxu0 0.0
    %388 = vmatprep.subr.mxu0 0.0
    %389 = vmatpush2.msra.mxu0 0.0
    %390 = vmatprep.subr.mxu0 0.0
    %391 = vmatpush2.msra.mxu0 0.0
    %392 = vmatprep.subr.mxu0 0.0
    %393 = vmatpush2.msra.mxu0 0.0
    %394 = vmatprep.subr.mxu0 0.0
    %395 = vmatpush2.msra.mxu0 0.0
    %396 = vmatprep.subr.mxu0 0.0
    %397 = vmatpush2.msra.mxu0 0.0
    %398 = vmatprep.subr.mxu0 0.0
    %399 = vmatpush2.msra.mxu0 0.0
    %400 = vmatprep.subr.mxu0 0.0
    %401 = vmatpush2.msra.mxu0 0.0
    %402 = vmatprep.subr.mxu0 0.0
    %403 = vmatpush2.msra.mxu0 0.0
    %404 = vmatprep.mubr.f32.mxu0 0.0
    %405 = vmatmul.mubr.f32.gmra.mxu0 %v338
    %v406 = vpop.f32.mrf.mxu0
    %v407 = vadd.f32 0.0, %v406
    %v408 = vpop.f32.mrf.mxu0
    %409 = vdwg.mxu0
    %v410 = vmul.f32 %v160, %v160
    %v411 = vmul.f32 %v165, %v165
    %v412 = vmul.f32 %v170, %v170
    %v413 = vmul.f32 %v175, %v175
    %v414 = vsel %vm180, %v410, 0.0
    %v415 = vsel %vm180, %v411, 0.0
    %v416 = vadd.f32 %v414, %v415
    %v417 = vsel %vm180, %v412, 0.0
    %v418 = vadd.f32 %v416, %v417
    %v419 = vsel %vm180, %v413, 0.0
    %v420 = vadd.f32 %v418, %v419
    %v421 = vrot.slane %v420, 4
    %v422 = vadd.f32 %v420, %v421
    %v423 = vrot.slane %v422, 2
    %v424 = vadd.f32 %v422, %v423
    %v425 = vrot.slane %v424, 1
    %v426 = vadd.f32 %v424, %v425
    %v428 = vsel %vm180, %v426, 0
    %430 = vmatprep.subr.mxu0 0.0
    %431 = vmatpush1.msra.mxu0 0.0
    %432 = vmatprep.subr.mxu0 0.0
    %433 = vmatpush1.msra.mxu0 0.0
    %434 = vmatprep.subr.mxu0 0.0
    %435 = vmatpush1.msra.mxu0 0.0
    %436 = vmatprep.subr.mxu0 0.0
    %437 = vmatpush1.msra.mxu0 0.0
    %438 = vmatprep.subr.mxu0 0.0
    %439 = vmatpush1.msra.mxu0 0.0
    %440 = vmatprep.subr.mxu0 0.0
    %441 = vmatpush1.msra.mxu0 0.0
    %442 = vmatprep.subr.mxu0 0.0
    %443 = vmatpush1.msra.mxu0 0.0
    %444 = vmatprep.subr.mxu0 0.0
    %445 = vmatpush1.msra.mxu0 0.0
    %446 = vmatprep.subr.mxu0 0.0
    %447 = vmatpush1.msra.mxu0 %v336
    %448 = vmatprep.subr.mxu0 0.0
    %449 = vmatpush1.msra.mxu0 %v335
    %450 = vmatprep.subr.mxu0 0.0
    %451 = vmatpush1.msra.mxu0 %v334
    %452 = vmatprep.subr.mxu0 0.0
    %453 = vmatpush1.msra.mxu0 %v333
    %454 = vmatprep.subr.mxu0 0.0
    %455 = vmatpush1.msra.mxu0 %v332
    %456 = vmatprep.subr.mxu0 0.0
    %457 = vmatpush1.msra.mxu0 %v331
    %458 = vmatprep.subr.mxu0 0.0
    %459 = vmatpush1.msra.mxu0 %v330
    %460 = vmatprep.subr.mxu0 0.0
    %461 = vmatpush1.msra.mxu0 %v329
    %462 = vmatprep.subr.mxu0 0.0
    %463 = vmatpush2.msra.mxu0 0.0
    %464 = vmatprep.subr.mxu0 0.0
    %465 = vmatpush2.msra.mxu0 0.0
    %466 = vmatprep.subr.mxu0 0.0
    %467 = vmatpush2.msra.mxu0 0.0
    %468 = vmatprep.subr.mxu0 0.0
    %469 = vmatpush2.msra.mxu0 0.0
    %470 = vmatprep.subr.mxu0 0.0
    %471 = vmatpush2.msra.mxu0 0.0
    %472 = vmatprep.subr.mxu0 0.0
    %473 = vmatpush2.msra.mxu0 0.0
    %474 = vmatprep.subr.mxu0 0.0
    %475 = vmatpush2.msra.mxu0 0.0
    %476 = vmatprep.subr.mxu0 0.0
    %477 = vmatpush2.msra.mxu0 0.0
    %478 = vmatprep.subr.mxu0 0.0
    %479 = vmatpush2.msra.mxu0 0.0
    %480 = vmatprep.subr.mxu0 0.0
    %481 = vmatpush2.msra.mxu0 0.0
    %482 = vmatprep.subr.mxu0 0.0
    %483 = vmatpush2.msra.mxu0 0.0
    %484 = vmatprep.subr.mxu0 0.0
    %485 = vmatpush2.msra.mxu0 0.0
    %486 = vmatprep.subr.mxu0 0.0
    %487 = vmatpush2.msra.mxu0 0.0
    %488 = vmatprep.subr.mxu0 0.0
    %489 = vmatpush2.msra.mxu0 0.0
    %490 = vmatprep.subr.mxu0 0.0
    %491 = vmatpush2.msra.mxu0 0.0
    %492 = vmatprep.subr.mxu0 0.0
    %493 = vmatpush2.msra.mxu0 0.0
    %494 = vmatprep.mubr.f32.mxu0 0.0
    %495 = vmatmul.mubr.f32.gmra.mxu0 %v428
    %v496 = vpop.f32.mrf.mxu0
    %v497 = vadd.f32 0.0, %v496
    %v498 = vpop.f32.mrf.mxu0
    %499 = vdwg.mxu0
    %v500 = vrcp.pop 512.0
    %v501 = vmul.f32 %v407, %v500
    %v502 = vmul.f32 %v497, %v500
    %v503 = vmul.f32 %v501, %v501
    %v504 = vsub.f32 %v502, %v503
    %v505 = vadd.f32 %v504, 1e-05
    %v506 = vrsqrt.pop %v505
    %v507 = vmul.f32 %v178, %v506
    %v508 = vmul.f32 %v501, %v507
    %v509 = vsub.f32 %v179, %v508
    %v511 = vlaneseq
    %v512 = vshrl.u32 %v511, 7
    %v513 = vsub.s32 0, %v512
    %v514 = vrot.slane %v507, %v513
    %v516 = vmul.f32 %v160, %v514
    %v517 = vmul.f32 %v165, %v514
    %v518 = vmul.f32 %v170, %v514
    %v519 = vmul.f32 %v175, %v514
    %v521 = vlaneseq
    %v522 = vshrl.u32 %v521, 7
    %v523 = vsub.s32 0, %v522
    %v524 = vrot.slane %v509, %v523
    %v526 = vadd.f32 %v516, %v524
    %v527 = vadd.f32 %v517, %v524
    %v528 = vadd.f32 %v518, %v524
    %v529 = vadd.f32 %v519, %v524
    %v530 = vmax.f32 %v526, 0.0
    %v531 = vmax.f32 %v527, 0.0
    %v532 = vmax.f32 %v528, 0.0
    %v533 = vmax.f32 %v529, 0.0
    %vm534 = vcmp.lt.s32.totalorder %v195, 0
    %v535 = vsub.s32 0, %v195
    %v536 = vsel %vm534, %v535, %v195
    %v537 = vshrl.u32 %v536, 4
    %v538 = vand.u32 %v536, 15
    %v539 = vsub.s32 0, %v538
    %v540 = vsel %vm534, %v539, %v538
    %vm541 = vcmp.lt.s32.totalorder %v196, 0
    %v542 = vsub.s32 0, %v196
    %v543 = vsel %vm541, %v542, %v196
    %v544 = vshrl.u32 %v543, 4
    %v545 = vand.u32 %v543, 15
    %v546 = vsub.s32 0, %v545
    %v547 = vsel %vm541, %v546, %v545
    %vm548 = vcmp.lt.s32.totalorder %v197, 0
    %v549 = vsub.s32 0, %v197
    %v550 = vsel %vm548, %v549, %v197
    %v551 = vshrl.u32 %v550, 4
    %v552 = vand.u32 %v550, 15
    %v553 = vsub.s32 0, %v552
    %v554 = vsel %vm548, %v553, %v552
    %vm555 = vcmp.lt.s32.totalorder %v198, 0
    %v556 = vsub.s32 0, %v198
    %v557 = vsel %vm555, %v556, %v198
    %v558 = vshrl.u32 %v557, 4
    %v559 = vand.u32 %v557, 15
    %v560 = vsub.s32 0, %v559
    %v561 = vsel %vm555, %v560, %v559
    %vm562 = vcmp.ne.s32.totalorder %v540, 0
    %vm563 = vcmp.ne.s32.totalorder %v547, 0
    %vm564 = vcmp.ne.s32.totalorder %v554, 0
    %vm565 = vcmp.ne.s32.totalorder %v561, 0
    %vm566 = vcmp.lt.s32.totalorder %v540, 0
    %vm567 = vcmp.lt.s32.totalorder %v547, 0
    %vm568 = vcmp.lt.s32.totalorder %v554, 0
    %vm569 = vcmp.lt.s32.totalorder %v561, 0
    %vm570 = vmand %vm566, %vm562
    %vm571 = vmand %vm567, %vm563
    %vm572 = vmand %vm568, %vm564
    %vm573 = vmand %vm569, %vm565
    %v574 = vadd.s32 %v540, 16
    %v575 = vadd.s32 %v547, 16
    %v576 = vadd.s32 %v554, 16
    %v577 = vadd.s32 %v561, 16
    %v578 = vsel %vm570, %v574, %v540
    %v579 = vsel %vm571, %v575, %v547
    %v580 = vsel %vm572, %v576, %v554
    %v581 = vsel %vm573, %v577, %v561
    %vm582 = vcmp.eq.s32.totalorder %v578, 15
    %vm583 = vcmp.eq.s32.totalorder %v579, 15
    %vm584 = vcmp.eq.s32.totalorder %v580, 15
    %vm585 = vcmp.eq.s32.totalorder %v581, 15
    %v586 = vrot.slane %v530, 1
    %v587 = vrot.slane %v531, 1
    %v588 = vrot.slane %v532, 1
    %v589 = vrot.slane %v533, 1
    %vm590 = vcmp.lt.s32.totalorder %v195, 7
    %v591 = vsel %vm590, %v588, %v589
    %v592 = vsel %vm590, %v587, %v588
    %v593 = vsel %vm590, %v586, %v587
    %v594 = vsel %vm590, %v589, %v586
    %v595 = vsel %vm582, 1, 0
    %v596 = vsel %vm583, 1, 0
    %v597 = vsel %vm584, 1, 0
    %v598 = vsel %vm585, 1, 0
    %vm599 = vcmp.eq.s32.totalorder %v595, 1
    %vm600 = vcmp.eq.s32.totalorder %v596, 1
    %vm601 = vcmp.eq.s32.totalorder %v597, 1
    %vm602 = vcmp.eq.s32.totalorder %v598, 1
    %v603 = vsel %vm599, 0.0, %v593
    %v604 = vsel %vm600, 0.0, %v592
    %v605 = vsel %vm601, 0.0, %v591
    %v606 = vsel %vm602, 0.0, %v594
    %v607 = vld [vmem:[%s2] sm:$0xff]
    %v608 = vld [vmem:[%s2 + $0x8] sm:$0xff]
    %v609 = vld [vmem:[%s2 + $0x10] sm:$0xff]
    %v610 = vld [vmem:[%s2 + $0x18] sm:$0xff]
    %v611 = vld [vmem:[%s2 + $0x20] sm:$0xff]
    %v612 = vld [vmem:[%s2 + $0x28] sm:$0xff]
    %v613 = vld [vmem:[%s2 + $0x30] sm:$0xff]
    %v614 = vld [vmem:[%s2 + $0x38] sm:$0xff]
    %v615 = vld [vmem:[%s2 + $0x40] sm:$0xff]
    %v616 = vld [vmem:[%s2 + $0x48] sm:$0xff]
    %v617 = vld [vmem:[%s2 + $0x50] sm:$0xff]
    %v618 = vld [vmem:[%s2 + $0x58] sm:$0xff]
    %v619 = vld [vmem:[%s2 + $0x60] sm:$0xff]
    %v620 = vld [vmem:[%s2 + $0x68] sm:$0xff]
    %v621 = vld [vmem:[%s2 + $0x70] sm:$0xff]
    %v622 = vld [vmem:[%s2 + $0x78] sm:$0xff]
    %v623 = vld [vmem:[%s3] sm:$0xff]
    %v624 = vld [vmem:[%s3 + $0x8] sm:$0xff]
    %v625 = vld [vmem:[%s3 + $0x10] sm:$0xff]
    %v626 = vld [vmem:[%s3 + $0x18] sm:$0xff]
    %v627 = vld [vmem:[%s3 + $0x20] sm:$0xff]
    %v628 = vld [vmem:[%s3 + $0x28] sm:$0xff]
    %v629 = vld [vmem:[%s3 + $0x30] sm:$0xff]
    %v630 = vld [vmem:[%s3 + $0x38] sm:$0xff]
    %v631 = vld [vmem:[%s3 + $0x40] sm:$0xff]
    %v632 = vld [vmem:[%s3 + $0x48] sm:$0xff]
    %v633 = vld [vmem:[%s3 + $0x50] sm:$0xff]
    %v634 = vld [vmem:[%s3 + $0x58] sm:$0xff]
    %v635 = vld [vmem:[%s3 + $0x60] sm:$0xff]
    %v636 = vld [vmem:[%s3 + $0x68] sm:$0xff]
    %v637 = vld [vmem:[%s3 + $0x70] sm:$0xff]
    %v638 = vld [vmem:[%s3 + $0x78] sm:$0xff]
    %v640 = vsel %vm180, %v603, 0
    %v643 = vsel %vm180, %v604, 0
    %v646 = vsel %vm180, %v605, 0
    %v649 = vsel %vm180, %v606, 0
    %651 = vmatprep.subr.mxu0 0.0
    %652 = vmatpush1.msra.mxu0 0.0
    %653 = vmatprep.subr.mxu0 0.0
    %654 = vmatpush1.msra.mxu0 0.0
    %655 = vmatprep.subr.mxu0 0.0
    %656 = vmatpush1.msra.mxu0 0.0
    %657 = vmatprep.subr.mxu0 0.0
    %658 = vmatpush1.msra.mxu0 0.0
    %659 = vmatprep.subr.mxu0 0.0
    %660 = vmatpush1.msra.mxu0 0.0
    %661 = vmatprep.subr.mxu0 0.0
    %662 = vmatpush1.msra.mxu0 0.0
    %663 = vmatprep.subr.mxu0 0.0
    %664 = vmatpush1.msra.mxu0 0.0
    %665 = vmatprep.subr.mxu0 0.0
    %666 = vmatpush1.msra.mxu0 0.0
    %667 = vmatprep.subr.mxu0 %v638
    %668 = vmatpush1.msra.mxu0 %v637
    %669 = vmatprep.subr.mxu0 %v636
    %670 = vmatpush1.msra.mxu0 %v635
    %671 = vmatprep.subr.mxu0 %v634
    %672 = vmatpush1.msra.mxu0 %v633
    %673 = vmatprep.subr.mxu0 %v632
    %674 = vmatpush1.msra.mxu0 %v631
    %675 = vmatprep.subr.mxu0 %v630
    %676 = vmatpush1.msra.mxu0 %v629
    %677 = vmatprep.subr.mxu0 %v628
    %678 = vmatpush1.msra.mxu0 %v627
    %679 = vmatprep.subr.mxu0 %v626
    %680 = vmatpush1.msra.mxu0 %v625
    %681 = vmatprep.subr.mxu0 %v624
    %682 = vmatpush1.msra.mxu0 %v623
    %683 = vmatprep.subr.mxu0 0.0
    %684 = vmatpush2.msra.mxu0 0.0
    %685 = vmatprep.subr.mxu0 0.0
    %686 = vmatpush2.msra.mxu0 0.0
    %687 = vmatprep.subr.mxu0 0.0
    %688 = vmatpush2.msra.mxu0 0.0
    %689 = vmatprep.subr.mxu0 0.0
    %690 = vmatpush2.msra.mxu0 0.0
    %691 = vmatprep.subr.mxu0 0.0
    %692 = vmatpush2.msra.mxu0 0.0
    %693 = vmatprep.subr.mxu0 0.0
    %694 = vmatpush2.msra.mxu0 0.0
    %695 = vmatprep.subr.mxu0 0.0
    %696 = vmatpush2.msra.mxu0 0.0
    %697 = vmatprep.subr.mxu0 0.0
    %698 = vmatpush2.msra.mxu0 0.0
    %699 = vmatprep.subr.mxu0 0.0
    %700 = vmatpush2.msra.mxu0 0.0
    %701 = vmatprep.subr.mxu0 0.0
    %702 = vmatpush2.msra.mxu0 0.0
    %703 = vmatprep.subr.mxu0 0.0
    %704 = vmatpush2.msra.mxu0 0.0
    %705 = vmatprep.subr.mxu0 0.0
    %706 = vmatpush2.msra.mxu0 0.0
    %707 = vmatprep.subr.mxu0 0.0
    %708 = vmatpush2.msra.mxu0 0.0
    %709 = vmatprep.subr.mxu0 0.0
    %710 = vmatpush2.msra.mxu0 0.0
    %711 = vmatprep.subr.mxu0 0.0
    %712 = vmatpush2.msra.mxu0 0.0
    %713 = vmatprep.subr.mxu0 0.0
    %714 = vmatpush2.msra.mxu0 0.0
    %715 = vmatprep.mubr.f32.mxu0 0.0
    %716 = vmatmul.mubr.f32.gmra.mxu0 %v640
    %v717 = vpop.f32.mrf.mxu0
    %v718 = vadd.f32 0.0, %v717
    %v719 = vpop.f32.mrf.mxu0
    %v720 = vadd.f32 0.0, %v719
    %721 = vmatprep.mubr.f32.mxu0 0.0
    %722 = vmatmul.mubr.f32.gmra.mxu0 %v643
    %v723 = vpop.f32.mrf.mxu0
    %v724 = vadd.f32 0.0, %v723
    %v725 = vpop.f32.mrf.mxu0
    %v726 = vadd.f32 0.0, %v725
    %727 = vmatprep.mubr.f32.mxu0 0.0
    %728 = vmatmul.mubr.f32.gmra.mxu0 %v646
    %v729 = vpop.f32.mrf.mxu0
    %v730 = vadd.f32 0.0, %v729
    %v731 = vpop.f32.mrf.mxu0
    %v732 = vadd.f32 0.0, %v731
    %733 = vmatprep.mubr.f32.mxu0 0.0
    %734 = vmatmul.mubr.f32.gmra.mxu0 %v649
    %v735 = vpop.f32.mrf.mxu0
    %v736 = vadd.f32 0.0, %v735
    %v737 = vpop.f32.mrf.mxu0
    %v738 = vadd.f32 0.0, %v737
    %739 = vdwg.mxu0
    %v741 = vsel %vm180, %v530, 0
    %v744 = vsel %vm180, %v531, 0
    %v747 = vsel %vm180, %v532, 0
    %v750 = vsel %vm180, %v533, 0
    %752 = vmatprep.subr.mxu0 0.0
    %753 = vmatpush1.msra.mxu0 0.0
    %754 = vmatprep.subr.mxu0 0.0
    %755 = vmatpush1.msra.mxu0 0.0
    %756 = vmatprep.subr.mxu0 0.0
    %757 = vmatpush1.msra.mxu0 0.0
    %758 = vmatprep.subr.mxu0 0.0
    %759 = vmatpush1.msra.mxu0 0.0
    %760 = vmatprep.subr.mxu0 0.0
    %761 = vmatpush1.msra.mxu0 0.0
    %762 = vmatprep.subr.mxu0 0.0
    %763 = vmatpush1.msra.mxu0 0.0
    %764 = vmatprep.subr.mxu0 0.0
    %765 = vmatpush1.msra.mxu0 0.0
    %766 = vmatprep.subr.mxu0 0.0
    %767 = vmatpush1.msra.mxu0 0.0
    %768 = vmatprep.subr.mxu0 %v622
    %769 = vmatpush1.msra.mxu0 %v621
    %770 = vmatprep.subr.mxu0 %v620
    %771 = vmatpush1.msra.mxu0 %v619
    %772 = vmatprep.subr.mxu0 %v618
    %773 = vmatpush1.msra.mxu0 %v617
    %774 = vmatprep.subr.mxu0 %v616
    %775 = vmatpush1.msra.mxu0 %v615
    %776 = vmatprep.subr.mxu0 %v614
    %777 = vmatpush1.msra.mxu0 %v613
    %778 = vmatprep.subr.mxu0 %v612
    %779 = vmatpush1.msra.mxu0 %v611
    %780 = vmatprep.subr.mxu0 %v610
    %781 = vmatpush1.msra.mxu0 %v609
    %782 = vmatprep.subr.mxu0 %v608
    %783 = vmatpush1.msra.mxu0 %v607
    %784 = vmatprep.subr.mxu0 0.0
    %785 = vmatpush2.msra.mxu0 0.0
    %786 = vmatprep.subr.mxu0 0.0
    %787 = vmatpush2.msra.mxu0 0.0
    %788 = vmatprep.subr.mxu0 0.0
    %789 = vmatpush2.msra.mxu0 0.0
    %790 = vmatprep.subr.mxu0 0.0
    %791 = vmatpush2.msra.mxu0 0.0
    %792 = vmatprep.subr.mxu0 0.0
    %793 = vmatpush2.msra.mxu0 0.0
    %794 = vmatprep.subr.mxu0 0.0
    %795 = vmatpush2.msra.mxu0 0.0
    %796 = vmatprep.subr.mxu0 0.0
    %797 = vmatpush2.msra.mxu0 0.0
    %798 = vmatprep.subr.mxu0 0.0
    %799 = vmatpush2.msra.mxu0 0.0
    %800 = vmatprep.subr.mxu0 0.0
    %801 = vmatpush2.msra.mxu0 0.0
    %802 = vmatprep.subr.mxu0 0.0
    %803 = vmatpush2.msra.mxu0 0.0
    %804 = vmatprep.subr.mxu0 0.0
    %805 = vmatpush2.msra.mxu0 0.0
    %806 = vmatprep.subr.mxu0 0.0
    %807 = vmatpush2.msra.mxu0 0.0
    %808 = vmatprep.subr.mxu0 0.0
    %809 = vmatpush2.msra.mxu0 0.0
    %810 = vmatprep.subr.mxu0 0.0
    %811 = vmatpush2.msra.mxu0 0.0
    %812 = vmatprep.subr.mxu0 0.0
    %813 = vmatpush2.msra.mxu0 0.0
    %814 = vmatprep.subr.mxu0 0.0
    %815 = vmatpush2.msra.mxu0 0.0
    %816 = vmatprep.mubr.f32.mxu0 0.0
    %817 = vmatmul.mubr.f32.gmra.mxu0 %v741
    %v818 = vpop.f32.mrf.mxu0
    %v819 = vadd.f32 %v718, %v818
    %v820 = vpop.f32.mrf.mxu0
    %v821 = vadd.f32 %v720, %v820
    %822 = vmatprep.mubr.f32.mxu0 0.0
    %823 = vmatmul.mubr.f32.gmra.mxu0 %v744
    %v824 = vpop.f32.mrf.mxu0
    %v825 = vadd.f32 %v724, %v824
    %v826 = vpop.f32.mrf.mxu0
    %v827 = vadd.f32 %v726, %v826
    %828 = vmatprep.mubr.f32.mxu0 0.0
    %829 = vmatmul.mubr.f32.gmra.mxu0 %v747
    %v830 = vpop.f32.mrf.mxu0
    %v831 = vadd.f32 %v730, %v830
    %v832 = vpop.f32.mrf.mxu0
    %v833 = vadd.f32 %v732, %v832
    %834 = vmatprep.mubr.f32.mxu0 0.0
    %835 = vmatmul.mubr.f32.gmra.mxu0 %v750
    %v836 = vpop.f32.mrf.mxu0
    %v837 = vadd.f32 %v736, %v836
    %v838 = vpop.f32.mrf.mxu0
    %v839 = vadd.f32 %v738, %v838
    %840 = vdwg.mxu0
    %v841 = vld [vmem:[%s7] sm:$0x3]
    %v842 = vld [vmem:[%s8] sm:$0x3]
    %v843 = vadd.f32 %v819, %v825
    %v844 = vadd.f32 %v843, %v831
    %v845 = vadd.f32 %v844, %v837
    %v846 = vrot.slane %v845, 4
    %v847 = vadd.f32 %v845, %v846
    %v848 = vrot.slane %v847, 2
    %v849 = vadd.f32 %v847, %v848
    %v850 = vrot.slane %v849, 1
    %v851 = vadd.f32 %v849, %v850
    %v852 = vadd.f32 %v821, %v827
    %v853 = vadd.f32 %v852, %v833
    %v854 = vadd.f32 %v853, %v839
    %v855 = vrot.slane %v854, 4
    %v856 = vadd.f32 %v854, %v855
    %v857 = vrot.slane %v856, 2
    %v858 = vadd.f32 %v856, %v857
    %v859 = vrot.slane %v858, 1
    %v860 = vadd.f32 %v858, %v859
    %861 = vrot.lane.b32.xlu0 %v851, 4
    %v862 = vpop.permute.xlu0 %861
    %863 = vrot.lane.b32.xlu0 %v860, 4
    %v864 = vpop.permute.xlu0 %863
    %vm865 = vcmp.lt.s32.totalorder %v204, 4
    %v866 = vsel %vm865, %v862, %v864
    %v867 = vsel %vm865, %v864, %v862
    %v868 = vadd.f32 %v851, %v867
    %v869 = vadd.f32 %v860, %v866
    %870 = vrot.lane.b32.xlu0 %v868, 8
    %v871 = vpop.permute.xlu0 %870
    %872 = vrot.lane.b32.xlu0 %v869, 8
    %v873 = vpop.permute.xlu0 %872
    %vm874 = vcmp.lt.s32.totalorder %v204, 8
    %v875 = vsel %vm874, %v871, %v873
    %v876 = vsel %vm874, %v873, %v871
    %v877 = vadd.f32 %v868, %v876
    %v878 = vadd.f32 %v869, %v875
    %879 = vrot.lane.b32.xlu0 %v877, 16
    %v880 = vpop.permute.xlu0 %879
    %881 = vrot.lane.b32.xlu0 %v878, 16
    %v882 = vpop.permute.xlu0 %881
    %vm883 = vcmp.lt.s32.totalorder %v204, 16
    %v884 = vsel %vm883, %v880, %v882
    %v885 = vsel %vm883, %v882, %v880
    %v886 = vadd.f32 %v877, %v885
    %v887 = vadd.f32 %v878, %v884
    %888 = vrot.lane.b32.xlu0 %v886, 32
    %v889 = vpop.permute.xlu0 %888
    %890 = vrot.lane.b32.xlu0 %v887, 32
    %v891 = vpop.permute.xlu0 %890
    %vm892 = vcmp.lt.s32.totalorder %v204, 32
    %v893 = vsel %vm892, %v889, %v891
    %v894 = vsel %vm892, %v891, %v889
    %v895 = vadd.f32 %v886, %v894
    %v896 = vadd.f32 %v887, %v893
    %897 = vrot.lane.b32.xlu0 %v895, 64
    %v898 = vpop.permute.xlu0 %897
    %899 = vrot.lane.b32.xlu0 %v896, 64
    %v900 = vpop.permute.xlu0 %899
    %vm901 = vcmp.lt.s32.totalorder %v204, 64
    %v902 = vsel %vm901, %v898, %v900
    %v903 = vsel %vm901, %v900, %v898
    %v904 = vadd.f32 %v895, %v903
    %v905 = vadd.f32 %v896, %v902
    %v906 = vadd.f32 %v904, %v905
    %v907 = vmul.f32 %v819, %v819
    %v908 = vmul.f32 %v821, %v821
    %v909 = vmul.f32 %v825, %v825
    %v910 = vmul.f32 %v827, %v827
    %v911 = vmul.f32 %v831, %v831
    %v912 = vmul.f32 %v833, %v833
    %v913 = vmul.f32 %v837, %v837
    %v914 = vmul.f32 %v839, %v839
    %v915 = vadd.f32 %v907, %v909
    %v916 = vadd.f32 %v915, %v911
    %v917 = vadd.f32 %v916, %v913
    %v918 = vrot.slane %v917, 4
    %v919 = vadd.f32 %v917, %v918
    %v920 = vrot.slane %v919, 2
    %v921 = vadd.f32 %v919, %v920
    %v922 = vrot.slane %v921, 1
    %v923 = vadd.f32 %v921, %v922
    %v924 = vadd.f32 %v908, %v910
    %v925 = vadd.f32 %v924, %v912
    %v926 = vadd.f32 %v925, %v914
    %v927 = vrot.slane %v926, 4
    %v928 = vadd.f32 %v926, %v927
    %v929 = vrot.slane %v928, 2
    %v930 = vadd.f32 %v928, %v929
    %v931 = vrot.slane %v930, 1
    %v932 = vadd.f32 %v930, %v931
    %933 = vrot.lane.b32.xlu0 %v923, 4
    %v934 = vpop.permute.xlu0 %933
    %935 = vrot.lane.b32.xlu0 %v932, 4
    %v936 = vpop.permute.xlu0 %935
    %v937 = vsel %vm865, %v934, %v936
    %v938 = vsel %vm865, %v936, %v934
    %v939 = vadd.f32 %v923, %v938
    %v940 = vadd.f32 %v932, %v937
    %941 = vrot.lane.b32.xlu0 %v939, 8
    %v942 = vpop.permute.xlu0 %941
    %943 = vrot.lane.b32.xlu0 %v940, 8
    %v944 = vpop.permute.xlu0 %943
    %v945 = vsel %vm874, %v942, %v944
    %v946 = vsel %vm874, %v944, %v942
    %v947 = vadd.f32 %v939, %v946
    %v948 = vadd.f32 %v940, %v945
    %949 = vrot.lane.b32.xlu0 %v947, 16
    %v950 = vpop.permute.xlu0 %949
    %951 = vrot.lane.b32.xlu0 %v948, 16
    %v952 = vpop.permute.xlu0 %951
    %v953 = vsel %vm883, %v950, %v952
    %v954 = vsel %vm883, %v952, %v950
    %v955 = vadd.f32 %v947, %v954
    %v956 = vadd.f32 %v948, %v953
    %957 = vrot.lane.b32.xlu0 %v955, 32
    %v958 = vpop.permute.xlu0 %957
    %959 = vrot.lane.b32.xlu0 %v956, 32
    %v960 = vpop.permute.xlu0 %959
    %v961 = vsel %vm892, %v958, %v960
    %v962 = vsel %vm892, %v960, %v958
    %v963 = vadd.f32 %v955, %v962
    %v964 = vadd.f32 %v956, %v961
    %965 = vrot.lane.b32.xlu0 %v963, 64
    %v966 = vpop.permute.xlu0 %965
    %967 = vrot.lane.b32.xlu0 %v964, 64
    %v968 = vpop.permute.xlu0 %967
    %v969 = vsel %vm901, %v966, %v968
    %v970 = vsel %vm901, %v968, %v966
    %v971 = vadd.f32 %v963, %v970
    %v972 = vadd.f32 %v964, %v969
    %v973 = vadd.f32 %v971, %v972
    %v974 = vrcp.pop 2048.0
    %v975 = vmul.f32 %v906, %v974
    %v976 = vmul.f32 %v973, %v974
    %v977 = vmul.f32 %v975, %v975
    %v978 = vsub.f32 %v976, %v977
    %v979 = vadd.f32 %v978, 1e-05
    %v980 = vrsqrt.pop %v979
    %v982 = vcombine.low %v980, %v980
    %v984 = vunpack.c.l.s4 1966171168
    %v985 = vunpack.c.0.s8 %v984
    %v986 = vlaneseq
    %v987 = vshrl.u32 %v986, 7
    %v988 = vsub.s32 %v985, %v987
    %v989 = vrot.slane %v982, %v988
    %v991 = vunpack.c.l.s4 1966171168
    %v992 = vunpack.c.0.s8 %v991
    %v993 = vlaneseq
    %v994 = vshrl.u32 %v993, 7
    %v995 = vsub.s32 %v992, %v994
    %v996 = vrot.slane %v989, %v995
    %v998 = vmul.f32 %v841, %v996
    %v1000 = vlaneseq
    %v1001 = vshrl.u32 %v1000, 7
    %v1002 = vsub.s32 0, %v1001
    %v1003 = vrot.slane %v998, %v1002
    %v1004 = vlaneseq
    %v1005 = vshrl.u32 %v1004, 7
    %v1006 = vsub.s32 1, %v1005
    %v1007 = vrot.slane %v998, %v1006
    %v1010 = vmul.f32 %v975, %v1003
    %v1011 = vmul.f32 %v975, %v1007
    %v1014 = vcombine.low %v1010, %v1011
    %v1016 = vunpack.c.l.s4 1966171168
    %v1017 = vunpack.c.0.s8 %v1016
    %v1018 = vlaneseq
    %v1019 = vshrl.u32 %v1018, 7
    %v1020 = vsub.s32 %v1017, %v1019
    %v1021 = vrot.slane %v1014, %v1020
    %v1023 = vunpack.c.l.s4 1966171168
    %v1024 = vunpack.c.0.s8 %v1023
    %v1025 = vlaneseq
    %v1026 = vshrl.u32 %v1025, 7
    %v1027 = vsub.s32 %v1024, %v1026
    %v1028 = vrot.slane %v1021, %v1027
    %v1030 = vsub.f32 %v842, %v1028
    %v1031 = vmul.f32 %v819, %v1003
    %v1032 = vmul.f32 %v821, %v1007
    %v1033 = vmul.f32 %v825, %v1003
    %v1034 = vmul.f32 %v827, %v1007
    %v1035 = vmul.f32 %v831, %v1003
    %v1036 = vmul.f32 %v833, %v1007
    %v1037 = vmul.f32 %v837, %v1003
    %v1038 = vmul.f32 %v839, %v1007
    %v1040 = vlaneseq
    %v1041 = vshrl.u32 %v1040, 7
    %v1042 = vsub.s32 0, %v1041
    %v1043 = vrot.slane %v1030, %v1042
    %v1044 = vlaneseq
    %v1045 = vshrl.u32 %v1044, 7
    %v1046 = vsub.s32 1, %v1045
    %v1047 = vrot.slane %v1030, %v1046
    %v1050 = vadd.f32 %v1031, %v1043
    %v1051 = vadd.f32 %v1032, %v1047
    %v1052 = vadd.f32 %v1033, %v1043
    %v1053 = vadd.f32 %v1034, %v1047
    %v1054 = vadd.f32 %v1035, %v1043
    %v1055 = vadd.f32 %v1036, %v1047
    %v1056 = vadd.f32 %v1037, %v1043
    %v1057 = vadd.f32 %v1038, %v1047
    %v1058 = vmax.f32 %v1050, 0.0
    %v1059 = vmax.f32 %v1051, 0.0
    %v1060 = vmax.f32 %v1052, 0.0
    %v1061 = vmax.f32 %v1053, 0.0
    %v1062 = vmax.f32 %v1054, 0.0
    %v1063 = vmax.f32 %v1055, 0.0
    %v1064 = vmax.f32 %v1056, 0.0
    %v1065 = vmax.f32 %v1057, 0.0
    %v1066 = vld [vmem:[#allocation2] sm:$0xff]
    %v1067 = vld [vmem:[#allocation2 + $0x8] sm:$0xff]
    %v1068 = vld [vmem:[#allocation2 + $0x10] sm:$0xff]
    %v1069 = vld [vmem:[#allocation2 + $0x18] sm:$0xff]
    %v1070 = vld [vmem:[#allocation2 + $0x20] sm:$0xff]
    %v1071 = vld [vmem:[#allocation2 + $0x28] sm:$0xff]
    %v1072 = vld [vmem:[#allocation2 + $0x30] sm:$0xff]
    %v1073 = vld [vmem:[#allocation2 + $0x38] sm:$0xff]
    %v1074 = vld [vmem:[#allocation2 + $0x40] sm:$0xff]
    %v1075 = vld [vmem:[#allocation2 + $0x48] sm:$0xff]
    %v1076 = vld [vmem:[#allocation2 + $0x50] sm:$0xff]
    %v1077 = vld [vmem:[#allocation2 + $0x58] sm:$0xff]
    %v1078 = vld [vmem:[#allocation2 + $0x60] sm:$0xff]
    %v1079 = vld [vmem:[#allocation2 + $0x68] sm:$0xff]
    %v1080 = vld [vmem:[#allocation2 + $0x70] sm:$0xff]
    %v1081 = vld [vmem:[#allocation2 + $0x78] sm:$0xff]
    %v1082 = vld [vmem:[#allocation2 + $0x80] sm:$0xff]
    %v1083 = vld [vmem:[#allocation2 + $0x88] sm:$0xff]
    %v1084 = vld [vmem:[#allocation2 + $0x90] sm:$0xff]
    %v1085 = vld [vmem:[#allocation2 + $0x98] sm:$0xff]
    %v1086 = vld [vmem:[#allocation2 + $0xa0] sm:$0xff]
    %v1087 = vld [vmem:[#allocation2 + $0xa8] sm:$0xff]
    %v1088 = vld [vmem:[#allocation2 + $0xb0] sm:$0xff]
    %v1089 = vld [vmem:[#allocation2 + $0xb8] sm:$0xff]
    %v1090 = vld [vmem:[#allocation2 + $0xc0] sm:$0xff]
    %v1091 = vld [vmem:[#allocation2 + $0xc8] sm:$0xff]
    %v1092 = vld [vmem:[#allocation2 + $0xd0] sm:$0xff]
    %v1093 = vld [vmem:[#allocation2 + $0xd8] sm:$0xff]
    %v1094 = vld [vmem:[#allocation2 + $0xe0] sm:$0xff]
    %v1095 = vld [vmem:[#allocation2 + $0xe8] sm:$0xff]
    %v1096 = vld [vmem:[#allocation2 + $0xf0] sm:$0xff]
    %v1097 = vld [vmem:[#allocation2 + $0xf8] sm:$0xff]
    %v1098 = vld [vmem:[#allocation2 + $0x100] sm:$0xff]
    %v1099 = vld [vmem:[#allocation2 + $0x108] sm:$0xff]
    %v1100 = vld [vmem:[#allocation2 + $0x110] sm:$0xff]
    %v1101 = vld [vmem:[#allocation2 + $0x118] sm:$0xff]
    %v1102 = vld [vmem:[#allocation2 + $0x120] sm:$0xff]
    %v1103 = vld [vmem:[#allocation2 + $0x128] sm:$0xff]
    %v1104 = vld [vmem:[#allocation2 + $0x130] sm:$0xff]
    %v1105 = vld [vmem:[#allocation2 + $0x138] sm:$0xff]
    %v1106 = vld [vmem:[#allocation2 + $0x140] sm:$0xff]
    %v1107 = vld [vmem:[#allocation2 + $0x148] sm:$0xff]
    %v1108 = vld [vmem:[#allocation2 + $0x150] sm:$0xff]
    %v1109 = vld [vmem:[#allocation2 + $0x158] sm:$0xff]
    %v1110 = vld [vmem:[#allocation2 + $0x160] sm:$0xff]
    %v1111 = vld [vmem:[#allocation2 + $0x168] sm:$0xff]
    %v1112 = vld [vmem:[#allocation2 + $0x170] sm:$0xff]
    %v1113 = vld [vmem:[#allocation2 + $0x178] sm:$0xff]
    %v1114 = vld [vmem:[#allocation2 + $0x180] sm:$0xff]
    %v1115 = vld [vmem:[#allocation2 + $0x188] sm:$0xff]
    %v1116 = vld [vmem:[#allocation2 + $0x190] sm:$0xff]
    %v1117 = vld [vmem:[#allocation2 + $0x198] sm:$0xff]
    %v1118 = vld [vmem:[#allocation2 + $0x1a0] sm:$0xff]
    %v1119 = vld [vmem:[#allocation2 + $0x1a8] sm:$0xff]
    %v1120 = vld [vmem:[#allocation2 + $0x1b0] sm:$0xff]
    %v1121 = vld [vmem:[#allocation2 + $0x1b8] sm:$0xff]
    %v1122 = vld [vmem:[#allocation2 + $0x1c0] sm:$0xff]
    %v1123 = vld [vmem:[#allocation2 + $0x1c8] sm:$0xff]
    %v1124 = vld [vmem:[#allocation2 + $0x1d0] sm:$0xff]
    %v1125 = vld [vmem:[#allocation2 + $0x1d8] sm:$0xff]
    %v1126 = vld [vmem:[#allocation2 + $0x1e0] sm:$0xff]
    %v1127 = vld [vmem:[#allocation2 + $0x1e8] sm:$0xff]
    %v1128 = vld [vmem:[#allocation2 + $0x1f0] sm:$0xff]
    %v1129 = vld [vmem:[#allocation2 + $0x1f8] sm:$0xff]
    %v1130 = vld [vmem:[#allocation2 + $0x200] sm:$0xff]
    %v1131 = vld [vmem:[#allocation2 + $0x208] sm:$0xff]
    %v1132 = vld [vmem:[#allocation2 + $0x210] sm:$0xff]
    %v1133 = vld [vmem:[#allocation2 + $0x218] sm:$0xff]
    %v1134 = vld [vmem:[#allocation2 + $0x220] sm:$0xff]
    %v1135 = vld [vmem:[#allocation2 + $0x228] sm:$0xff]
    %v1136 = vld [vmem:[#allocation2 + $0x230] sm:$0xff]
    %v1137 = vld [vmem:[#allocation2 + $0x238] sm:$0xff]
    %v1138 = vld [vmem:[#allocation2 + $0x240] sm:$0xff]
    %v1139 = vld [vmem:[#allocation2 + $0x248] sm:$0xff]
    %v1140 = vld [vmem:[#allocation2 + $0x250] sm:$0xff]
    %v1141 = vld [vmem:[#allocation2 + $0x258] sm:$0xff]
    %v1142 = vld [vmem:[#allocation2 + $0x260] sm:$0xff]
    %v1143 = vld [vmem:[#allocation2 + $0x268] sm:$0xff]
    %v1144 = vld [vmem:[#allocation2 + $0x270] sm:$0xff]
    %v1145 = vld [vmem:[#allocation2 + $0x278] sm:$0xff]
    %v1146 = vld [vmem:[#allocation2 + $0x280] sm:$0xff]
    %v1147 = vld [vmem:[#allocation2 + $0x288] sm:$0xff]
    %v1148 = vld [vmem:[#allocation2 + $0x290] sm:$0xff]
    %v1149 = vld [vmem:[#allocation2 + $0x298] sm:$0xff]
    %v1150 = vld [vmem:[#allocation2 + $0x2a0] sm:$0xff]
    %v1151 = vld [vmem:[#allocation2 + $0x2a8] sm:$0xff]
    %v1152 = vld [vmem:[#allocation2 + $0x2b0] sm:$0xff]
    %v1153 = vld [vmem:[#allocation2 + $0x2b8] sm:$0xff]
    %v1154 = vld [vmem:[#allocation2 + $0x2c0] sm:$0xff]
    %v1155 = vld [vmem:[#allocation2 + $0x2c8] sm:$0xff]
    %v1156 = vld [vmem:[#allocation2 + $0x2d0] sm:$0xff]
    %v1157 = vld [vmem:[#allocation2 + $0x2d8] sm:$0xff]
    %v1158 = vld [vmem:[#allocation2 + $0x2e0] sm:$0xff]
    %v1159 = vld [vmem:[#allocation2 + $0x2e8] sm:$0xff]
    %v1160 = vld [vmem:[#allocation2 + $0x2f0] sm:$0xff]
    %v1161 = vld [vmem:[#allocation2 + $0x2f8] sm:$0xff]
    %v1162 = vld [vmem:[#allocation2 + $0x300] sm:$0xff]
    %v1163 = vld [vmem:[#allocation2 + $0x308] sm:$0xff]
    %v1164 = vld [vmem:[#allocation2 + $0x310] sm:$0xff]
    %v1165 = vld [vmem:[#allocation2 + $0x318] sm:$0xff]
    %v1166 = vld [vmem:[#allocation2 + $0x320] sm:$0xff]
    %v1167 = vld [vmem:[#allocation2 + $0x328] sm:$0xff]
    %v1168 = vld [vmem:[#allocation2 + $0x330] sm:$0xff]
    %v1169 = vld [vmem:[#allocation2 + $0x338] sm:$0xff]
    %v1170 = vld [vmem:[#allocation2 + $0x340] sm:$0xff]
    %v1171 = vld [vmem:[#allocation2 + $0x348] sm:$0xff]
    %v1172 = vld [vmem:[#allocation2 + $0x350] sm:$0xff]
    %v1173 = vld [vmem:[#allocation2 + $0x358] sm:$0xff]
    %v1174 = vld [vmem:[#allocation2 + $0x360] sm:$0xff]
    %v1175 = vld [vmem:[#allocation2 + $0x368] sm:$0xff]
    %v1176 = vld [vmem:[#allocation2 + $0x370] sm:$0xff]
    %v1177 = vld [vmem:[#allocation2 + $0x378] sm:$0xff]
    %v1178 = vld [vmem:[#allocation2 + $0x380] sm:$0xff]
    %v1179 = vld [vmem:[#allocation2 + $0x388] sm:$0xff]
    %v1180 = vld [vmem:[#allocation2 + $0x390] sm:$0xff]
    %v1181 = vld [vmem:[#allocation2 + $0x398] sm:$0xff]
    %v1182 = vld [vmem:[#allocation2 + $0x3a0] sm:$0xff]
    %v1183 = vld [vmem:[#allocation2 + $0x3a8] sm:$0xff]
    %v1184 = vld [vmem:[#allocation2 + $0x3b0] sm:$0xff]
    %v1185 = vld [vmem:[#allocation2 + $0x3b8] sm:$0xff]
    %v1186 = vld [vmem:[#allocation2 + $0x3c0] sm:$0xff]
    %v1187 = vld [vmem:[#allocation2 + $0x3c8] sm:$0xff]
    %v1188 = vld [vmem:[#allocation2 + $0x3d0] sm:$0xff]
    %v1189 = vld [vmem:[#allocation2 + $0x3d8] sm:$0xff]
    %v1190 = vld [vmem:[#allocation2 + $0x3e0] sm:$0xff]
    %v1191 = vld [vmem:[#allocation2 + $0x3e8] sm:$0xff]
    %v1192 = vld [vmem:[#allocation2 + $0x3f0] sm:$0xff]
    %v1193 = vld [vmem:[#allocation2 + $0x3f8] sm:$0xff]
    %1194 = vmatprep.subr.mxu0 %v1127
    %1195 = vmatpush1.msra.mxu0 %v1126
    %1196 = vmatprep.subr.mxu0 %v1123
    %1197 = vmatpush1.msra.mxu0 %v1122
    %1198 = vmatprep.subr.mxu0 %v1119
    %1199 = vmatpush1.msra.mxu0 %v1118
    %1200 = vmatprep.subr.mxu0 %v1115
    %1201 = vmatpush1.msra.mxu0 %v1114
    %1202 = vmatprep.subr.mxu0 %v1111
    %1203 = vmatpush1.msra.mxu0 %v1110
    %1204 = vmatprep.subr.mxu0 %v1107
    %1205 = vmatpush1.msra.mxu0 %v1106
    %1206 = vmatprep.subr.mxu0 %v1103
    %1207 = vmatpush1.msra.mxu0 %v1102
    %1208 = vmatprep.subr.mxu0 %v1099
    %1209 = vmatpush1.msra.mxu0 %v1098
    %1210 = vmatprep.subr.mxu0 %v1095
    %1211 = vmatpush1.msra.mxu0 %v1094
    %1212 = vmatprep.subr.mxu0 %v1091
    %1213 = vmatpush1.msra.mxu0 %v1090
    %1214 = vmatprep.subr.mxu0 %v1087
    %1215 = vmatpush1.msra.mxu0 %v1086
    %1216 = vmatprep.subr.mxu0 %v1083
    %1217 = vmatpush1.msra.mxu0 %v1082
    %1218 = vmatprep.subr.mxu0 %v1079
    %1219 = vmatpush1.msra.mxu0 %v1078
    %1220 = vmatprep.subr.mxu0 %v1075
    %1221 = vmatpush1.msra.mxu0 %v1074
    %1222 = vmatprep.subr.mxu0 %v1071
    %1223 = vmatpush1.msra.mxu0 %v1070
    %1224 = vmatprep.subr.mxu0 %v1067
    %1225 = vmatpush1.msra.mxu0 %v1066
    %1226 = vmatprep.subr.mxu0 %v1191
    %1227 = vmatpush2.msra.mxu0 %v1190
    %1228 = vmatprep.subr.mxu0 %v1187
    %1229 = vmatpush2.msra.mxu0 %v1186
    %1230 = vmatprep.subr.mxu0 %v1183
    %1231 = vmatpush2.msra.mxu0 %v1182
    %1232 = vmatprep.subr.mxu0 %v1179
    %1233 = vmatpush2.msra.mxu0 %v1178
    %1234 = vmatprep.subr.mxu0 %v1175
    %1235 = vmatpush2.msra.mxu0 %v1174
    %1236 = vmatprep.subr.mxu0 %v1171
    %1237 = vmatpush2.msra.mxu0 %v1170
    %1238 = vmatprep.subr.mxu0 %v1167
    %1239 = vmatpush2.msra.mxu0 %v1166
    %1240 = vmatprep.subr.mxu0 %v1163
    %1241 = vmatpush2.msra.mxu0 %v1162
    %1242 = vmatprep.subr.mxu0 %v1159
    %1243 = vmatpush2.msra.mxu0 %v1158
    %1244 = vmatprep.subr.mxu0 %v1155
    %1245 = vmatpush2.msra.mxu0 %v1154
    %1246 = vmatprep.subr.mxu0 %v1151
    %1247 = vmatpush2.msra.mxu0 %v1150
    %1248 = vmatprep.subr.mxu0 %v1147
    %1249 = vmatpush2.msra.mxu0 %v1146
    %1250 = vmatprep.subr.mxu0 %v1143
    %1251 = vmatpush2.msra.mxu0 %v1142
    %1252 = vmatprep.subr.mxu0 %v1139
    %1253 = vmatpush2.msra.mxu0 %v1138
    %1254 = vmatprep.subr.mxu0 %v1135
    %1255 = vmatpush2.msra.mxu0 %v1134
    %1256 = vmatprep.subr.mxu0 %v1131
    %1257 = vmatpush2.msra.mxu0 %v1130
    %1258 = vmatprep.mubr.f32.mxu0 %v1059
    %1259 = vmatmul.mubr.f32.gmra.mxu0 %v1058
    %v1260 = vpop.f32.mrf.mxu0
    %v1261 = vadd.f32 0.0, %v1260
    %v1262 = vpop.f32.mrf.mxu0
    %v1263 = vadd.f32 0.0, %v1262
    %1264 = vmatprep.mubr.f32.mxu0 %v1061
    %1265 = vmatmul.mubr.f32.gmra.mxu0 %v1060
    %v1266 = vpop.f32.mrf.mxu0
    %v1267 = vadd.f32 0.0, %v1266
    %v1268 = vpop.f32.mrf.mxu0
    %v1269 = vadd.f32 0.0, %v1268
    %1270 = vmatprep.mubr.f32.mxu0 %v1063
    %1271 = vmatmul.mubr.f32.gmra.mxu0 %v1062
    %v1272 = vpop.f32.mrf.mxu0
    %v1273 = vadd.f32 0.0, %v1272
    %v1274 = vpop.f32.mrf.mxu0
    %v1275 = vadd.f32 0.0, %v1274
    %1276 = vmatprep.mubr.f32.mxu0 %v1065
    %1277 = vmatmul.mubr.f32.gmra.mxu0 %v1064
    %v1278 = vpop.f32.mrf.mxu0
    %v1279 = vadd.f32 0.0, %v1278
    %v1280 = vpop.f32.mrf.mxu0
    %v1281 = vadd.f32 0.0, %v1280
    %1282 = vdwg.mxu0
    %1283 = vmatprep.subr.mxu0 %v1129
    %1284 = vmatpush1.msra.mxu0 %v1128
    %1285 = vmatprep.subr.mxu0 %v1125
    %1286 = vmatpush1.msra.mxu0 %v1124
    %1287 = vmatprep.subr.mxu0 %v1121
    %1288 = vmatpush1.msra.mxu0 %v1120
    %1289 = vmatprep.subr.mxu0 %v1117
    %1290 = vmatpush1.msra.mxu0 %v1116
    %1291 = vmatprep.subr.mxu0 %v1113
    %1292 = vmatpush1.msra.mxu0 %v1112
    %1293 = vmatprep.subr.mxu0 %v1109
    %1294 = vmatpush1.msra.mxu0 %v1108
    %1295 = vmatprep.subr.mxu0 %v1105
    %1296 = vmatpush1.msra.mxu0 %v1104
    %1297 = vmatprep.subr.mxu0 %v1101
    %1298 = vmatpush1.msra.mxu0 %v1100
    %1299 = vmatprep.subr.mxu0 %v1097
    %1300 = vmatpush1.msra.mxu0 %v1096
    %1301 = vmatprep.subr.mxu0 %v1093
    %1302 = vmatpush1.msra.mxu0 %v1092
    %1303 = vmatprep.subr.mxu0 %v1089
    %1304 = vmatpush1.msra.mxu0 %v1088
    %1305 = vmatprep.subr.mxu0 %v1085
    %1306 = vmatpush1.msra.mxu0 %v1084
    %1307 = vmatprep.subr.mxu0 %v1081
    %1308 = vmatpush1.msra.mxu0 %v1080
    %1309 = vmatprep.subr.mxu0 %v1077
    %1310 = vmatpush1.msra.mxu0 %v1076
    %1311 = vmatprep.subr.mxu0 %v1073
    %1312 = vmatpush1.msra.mxu0 %v1072
    %1313 = vmatprep.subr.mxu0 %v1069
    %1314 = vmatpush1.msra.mxu0 %v1068
    %1315 = vmatprep.subr.mxu0 %v1193
    %1316 = vmatpush2.msra.mxu0 %v1192
    %1317 = vmatprep.subr.mxu0 %v1189
    %1318 = vmatpush2.msra.mxu0 %v1188
    %1319 = vmatprep.subr.mxu0 %v1185
    %1320 = vmatpush2.msra.mxu0 %v1184
    %1321 = vmatprep.subr.mxu0 %v1181
    %1322 = vmatpush2.msra.mxu0 %v1180
    %1323 = vmatprep.subr.mxu0 %v1177
    %1324 = vmatpush2.msra.mxu0 %v1176
    %1325 = vmatprep.subr.mxu0 %v1173
    %1326 = vmatpush2.msra.mxu0 %v1172
    %1327 = vmatprep.subr.mxu0 %v1169
    %1328 = vmatpush2.msra.mxu0 %v1168
    %1329 = vmatprep.subr.mxu0 %v1165
    %1330 = vmatpush2.msra.mxu0 %v1164
    %1331 = vmatprep.subr.mxu0 %v1161
    %1332 = vmatpush2.msra.mxu0 %v1160
    %1333 = vmatprep.subr.mxu0 %v1157
    %1334 = vmatpush2.msra.mxu0 %v1156
    %1335 = vmatprep.subr.mxu0 %v1153
    %1336 = vmatpush2.msra.mxu0 %v1152
    %1337 = vmatprep.subr.mxu0 %v1149
    %1338 = vmatpush2.msra.mxu0 %v1148
    %1339 = vmatprep.subr.mxu0 %v1145
    %1340 = vmatpush2.msra.mxu0 %v1144
    %1341 = vmatprep.subr.mxu0 %v1141
    %1342 = vmatpush2.msra.mxu0 %v1140
    %1343 = vmatprep.subr.mxu0 %v1137
    %1344 = vmatpush2.msra.mxu0 %v1136
    %1345 = vmatprep.subr.mxu0 %v1133
    %1346 = vmatpush2.msra.mxu0 %v1132
    %1347 = vmatprep.mubr.f32.mxu0 %v1059
    %1348 = vmatmul.mubr.f32.gmra.mxu0 %v1058
    %v1349 = vpop.f32.mrf.mxu0
    %v1350 = vadd.f32 0.0, %v1349
    %v1351 = vpop.f32.mrf.mxu0
    %v1352 = vadd.f32 0.0, %v1351
    %1353 = vmatprep.mubr.f32.mxu0 %v1061
    %1354 = vmatmul.mubr.f32.gmra.mxu0 %v1060
    %v1355 = vpop.f32.mrf.mxu0
    %v1356 = vadd.f32 0.0, %v1355
    %v1357 = vpop.f32.mrf.mxu0
    %v1358 = vadd.f32 0.0, %v1357
    %1359 = vmatprep.mubr.f32.mxu0 %v1063
    %1360 = vmatmul.mubr.f32.gmra.mxu0 %v1062
    %v1361 = vpop.f32.mrf.mxu0
    %v1362 = vadd.f32 0.0, %v1361
    %v1363 = vpop.f32.mrf.mxu0
    %v1364 = vadd.f32 0.0, %v1363
    %1365 = vmatprep.mubr.f32.mxu0 %v1065
    %1366 = vmatmul.mubr.f32.gmra.mxu0 %v1064
    %v1367 = vpop.f32.mrf.mxu0
    %v1368 = vadd.f32 0.0, %v1367
    %v1369 = vpop.f32.mrf.mxu0
    %v1370 = vadd.f32 0.0, %v1369
    %1371 = vdwg.mxu0
    %v1372 = vld [vmem:[%s9] sm:$0xf]
    %v1373 = vld [vmem:[%s10] sm:$0xf]
    %v1374 = vadd.f32 %v1261, %v1267
    %v1375 = vadd.f32 %v1374, %v1273
    %v1376 = vadd.f32 %v1375, %v1279
    %v1377 = vrot.slane %v1376, 4
    %v1378 = vadd.f32 %v1376, %v1377
    %v1379 = vrot.slane %v1378, 2
    %v1380 = vadd.f32 %v1378, %v1379
    %v1381 = vrot.slane %v1380, 1
    %v1382 = vadd.f32 %v1380, %v1381
    %v1383 = vadd.f32 %v1263, %v1269
    %v1384 = vadd.f32 %v1383, %v1275
    %v1385 = vadd.f32 %v1384, %v1281
    %v1386 = vrot.slane %v1385, 4
    %v1387 = vadd.f32 %v1385, %v1386
    %v1388 = vrot.slane %v1387, 2
    %v1389 = vadd.f32 %v1387, %v1388
    %v1390 = vrot.slane %v1389, 1
    %v1391 = vadd.f32 %v1389, %v1390
    %v1392 = vadd.f32 %v1350, %v1356
    %v1393 = vadd.f32 %v1392, %v1362
    %v1394 = vadd.f32 %v1393, %v1368
    %v1395 = vrot.slane %v1394, 4
    %v1396 = vadd.f32 %v1394, %v1395
    %v1397 = vrot.slane %v1396, 2
    %v1398 = vadd.f32 %v1396, %v1397
    %v1399 = vrot.slane %v1398, 1
    %v1400 = vadd.f32 %v1398, %v1399
    %v1401 = vadd.f32 %v1352, %v1358
    %v1402 = vadd.f32 %v1401, %v1364
    %v1403 = vadd.f32 %v1402, %v1370
    %v1404 = vrot.slane %v1403, 4
    %v1405 = vadd.f32 %v1403, %v1404
    %v1406 = vrot.slane %v1405, 2
    %v1407 = vadd.f32 %v1405, %v1406
    %v1408 = vrot.slane %v1407, 1
    %v1409 = vadd.f32 %v1407, %v1408
    %1410 = vrot.lane.b32.xlu0 %v1382, 8
    %v1411 = vpop.permute.xlu0 %1410
    %1412 = vrot.lane.b32.xlu0 %v1391, 8
    %v1413 = vpop.permute.xlu0 %1412
    %1414 = vrot.lane.b32.xlu0 %v1400, 8
    %v1415 = vpop.permute.xlu0 %1414
    %1416 = vrot.lane.b32.xlu0 %v1409, 8
    %v1417 = vpop.permute.xlu0 %1416
    %v1418 = vsel %vm874, %v1415, %v1417
    %v1419 = vsel %vm874, %v1413, %v1415
    %v1420 = vsel %vm874, %v1411, %v1413
    %v1421 = vsel %vm874, %v1417, %v1411
    %v1422 = vadd.f32 %v1382, %v1421
    %v1423 = vadd.f32 %v1391, %v1420
    %v1424 = vadd.f32 %v1400, %v1419
    %v1425 = vadd.f32 %v1409, %v1418
    %1426 = vrot.lane.b32.xlu0 %v1422, 16
    %v1427 = vpop.permute.xlu0 %1426
    %1428 = vrot.lane.b32.xlu0 %v1423, 16
    %v1429 = vpop.permute.xlu0 %1428
    %1430 = vrot.lane.b32.xlu0 %v1424, 16
    %v1431 = vpop.permute.xlu0 %1430
    %1432 = vrot.lane.b32.xlu0 %v1425, 16
    %v1433 = vpop.permute.xlu0 %1432
    %v1434 = vsel %vm883, %v1431, %v1433
    %v1435 = vsel %vm883, %v1429, %v1431
    %v1436 = vsel %vm883, %v1427, %v1429
    %v1437 = vsel %vm883, %v1433, %v1427
    %v1438 = vadd.f32 %v1422, %v1437
    %v1439 = vadd.f32 %v1423, %v1436
    %v1440 = vadd.f32 %v1424, %v1435
    %v1441 = vadd.f32 %v1425, %v1434
    %1442 = vrot.lane.b32.xlu0 %v1438, 32
    %v1443 = vpop.permute.xlu0 %1442
    %1444 = vrot.lane.b32.xlu0 %v1439, 32
    %v1445 = vpop.permute.xlu0 %1444
    %1446 = vrot.lane.b32.xlu0 %v1440, 32
    %v1447 = vpop.permute.xlu0 %1446
    %1448 = vrot.lane.b32.xlu0 %v1441, 32
    %v1449 = vpop.permute.xlu0 %1448
    %v1450 = vsel %vm892, %v1447, %v1449
    %v1451 = vsel %vm892, %v1445, %v1447
    %v1452 = vsel %vm892, %v1443, %v1445
    %v1453 = vsel %vm892, %v1449, %v1443
    %v1454 = vadd.f32 %v1438, %v1453
    %v1455 = vadd.f32 %v1439, %v1452
    %v1456 = vadd.f32 %v1440, %v1451
    %v1457 = vadd.f32 %v1441, %v1450
    %1458 = vrot.lane.b32.xlu0 %v1454, 64
    %v1459 = vpop.permute.xlu0 %1458
    %1460 = vrot.lane.b32.xlu0 %v1455, 64
    %v1461 = vpop.permute.xlu0 %1460
    %1462 = vrot.lane.b32.xlu0 %v1456, 64
    %v1463 = vpop.permute.xlu0 %1462
    %1464 = vrot.lane.b32.xlu0 %v1457, 64
    %v1465 = vpop.permute.xlu0 %1464
    %v1466 = vsel %vm901, %v1463, %v1465
    %v1467 = vsel %vm901, %v1461, %v1463
    %v1468 = vsel %vm901, %v1459, %v1461
    %v1469 = vsel %vm901, %v1465, %v1459
    %v1470 = vadd.f32 %v1454, %v1469
    %v1471 = vadd.f32 %v1455, %v1468
    %v1472 = vadd.f32 %v1456, %v1467
    %v1473 = vadd.f32 %v1457, %v1466
    %v1474 = vadd.f32 %v1470, %v1473
    %v1475 = vadd.f32 %v1471, %v1470
    %v1476 = vadd.f32 %v1472, %v1471
    %v1477 = vadd.f32 %v1473, %v1472
    %v1478 = vadd.f32 %v1474, %v1476
    %v1479 = vadd.f32 %v1475, %v1477
    %v1480 = vmul.f32 %v1261, %v1261
    %v1481 = vmul.f32 %v1263, %v1263
    %v1482 = vmul.f32 %v1350, %v1350
    %v1483 = vmul.f32 %v1352, %v1352
    %v1484 = vmul.f32 %v1267, %v1267
    %v1485 = vmul.f32 %v1269, %v1269
    %v1486 = vmul.f32 %v1356, %v1356
    %v1487 = vmul.f32 %v1358, %v1358
    %v1488 = vmul.f32 %v1273, %v1273
    %v1489 = vmul.f32 %v1275, %v1275
    %v1490 = vmul.f32 %v1362, %v1362
    %v1491 = vmul.f32 %v1364, %v1364
    %v1492 = vmul.f32 %v1279, %v1279
    %v1493 = vmul.f32 %v1281, %v1281
    %v1494 = vmul.f32 %v1368, %v1368
    %v1495 = vmul.f32 %v1370, %v1370
    %v1496 = vadd.f32 %v1480, %v1484
    %v1497 = vadd.f32 %v1496, %v1488
    %v1498 = vadd.f32 %v1497, %v1492
    %v1499 = vrot.slane %v1498, 4
    %v1500 = vadd.f32 %v1498, %v1499
    %v1501 = vrot.slane %v1500, 2
    %v1502 = vadd.f32 %v1500, %v1501
    %v1503 = vrot.slane %v1502, 1
    %v1504 = vadd.f32 %v1502, %v1503
    %v1505 = vadd.f32 %v1481, %v1485
    %v1506 = vadd.f32 %v1505, %v1489
    %v1507 = vadd.f32 %v1506, %v1493
    %v1508 = vrot.slane %v1507, 4
    %v1509 = vadd.f32 %v1507, %v1508
    %v1510 = vrot.slane %v1509, 2
    %v1511 = vadd.f32 %v1509, %v1510
    %v1512 = vrot.slane %v1511, 1
    %v1513 = vadd.f32 %v1511, %v1512
    %v1514 = vadd.f32 %v1482, %v1486
    %v1515 = vadd.f32 %v1514, %v1490
    %v1516 = vadd.f32 %v1515, %v1494
    %v1517 = vrot.slane %v1516, 4
    %v1518 = vadd.f32 %v1516, %v1517
    %v1519 = vrot.slane %v1518, 2
    %v1520 = vadd.f32 %v1518, %v1519
    %v1521 = vrot.slane %v1520, 1
    %v1522 = vadd.f32 %v1520, %v1521
    %v1523 = vadd.f32 %v1483, %v1487
    %v1524 = vadd.f32 %v1523, %v1491
    %v1525 = vadd.f32 %v1524, %v1495
    %v1526 = vrot.slane %v1525, 4
    %v1527 = vadd.f32 %v1525, %v1526
    %v1528 = vrot.slane %v1527, 2
    %v1529 = vadd.f32 %v1527, %v1528
    %v1530 = vrot.slane %v1529, 1
    %v1531 = vadd.f32 %v1529, %v1530
    %1532 = vrot.lane.b32.xlu0 %v1504, 8
    %v1533 = vpop.permute.xlu0 %1532
    %1534 = vrot.lane.b32.xlu0 %v1513, 8
    %v1535 = vpop.permute.xlu0 %1534
    %1536 = vrot.lane.b32.xlu0 %v1522, 8
    %v1537 = vpop.permute.xlu0 %1536
    %1538 = vrot.lane.b32.xlu0 %v1531, 8
    %v1539 = vpop.permute.xlu0 %1538
    %v1540 = vsel %vm874, %v1537, %v1539
    %v1541 = vsel %vm874, %v1535, %v1537
    %v1542 = vsel %vm874, %v1533, %v1535
    %v1543 = vsel %vm874, %v1539, %v1533
    %v1544 = vadd.f32 %v1504, %v1543
    %v1545 = vadd.f32 %v1513, %v1542
    %v1546 = vadd.f32 %v1522, %v1541
    %v1547 = vadd.f32 %v1531, %v1540
    %1548 = vrot.lane.b32.xlu0 %v1544, 16
    %v1549 = vpop.permute.xlu0 %1548
    %1550 = vrot.lane.b32.xlu0 %v1545, 16
    %v1551 = vpop.permute.xlu0 %1550
    %1552 = vrot.lane.b32.xlu0 %v1546, 16
    %v1553 = vpop.permute.xlu0 %1552
    %1554 = vrot.lane.b32.xlu0 %v1547, 16
    %v1555 = vpop.permute.xlu0 %1554
    %v1556 = vsel %vm883, %v1553, %v1555
    %v1557 = vsel %vm883, %v1551, %v1553
    %v1558 = vsel %vm883, %v1549, %v1551
    %v1559 = vsel %vm883, %v1555, %v1549
    %v1560 = vadd.f32 %v1544, %v1559
    %v1561 = vadd.f32 %v1545, %v1558
    %v1562 = vadd.f32 %v1546, %v1557
    %v1563 = vadd.f32 %v1547, %v1556
    %1564 = vrot.lane.b32.xlu0 %v1560, 32
    %v1565 = vpop.permute.xlu0 %1564
    %1566 = vrot.lane.b32.xlu0 %v1561, 32
    %v1567 = vpop.permute.xlu0 %1566
    %1568 = vrot.lane.b32.xlu0 %v1562, 32
    %v1569 = vpop.permute.xlu0 %1568
    %1570 = vrot.lane.b32.xlu0 %v1563, 32
    %v1571 = vpop.permute.xlu0 %1570
    %v1572 = vsel %vm892, %v1569, %v1571
    %v1573 = vsel %vm892, %v1567, %v1569
    %v1574 = vsel %vm892, %v1565, %v1567
    %v1575 = vsel %vm892, %v1571, %v1565
    %v1576 = vadd.f32 %v1560, %v1575
    %v1577 = vadd.f32 %v1561, %v1574
    %v1578 = vadd.f32 %v1562, %v1573
    %v1579 = vadd.f32 %v1563, %v1572
    %1580 = vrot.lane.b32.xlu0 %v1576, 64
    %v1581 = vpop.permute.xlu0 %1580
    %1582 = vrot.lane.b32.xlu0 %v1577, 64
    %v1583 = vpop.permute.xlu0 %1582
    %1584 = vrot.lane.b32.xlu0 %v1578, 64
    %v1585 = vpop.permute.xlu0 %1584
    %1586 = vrot.lane.b32.xlu0 %v1579, 64
    %v1587 = vpop.permute.xlu0 %1586
    %v1588 = vsel %vm901, %v1585, %v1587
    %v1589 = vsel %vm901, %v1583, %v1585
    %v1590 = vsel %vm901, %v1581, %v1583
    %v1591 = vsel %vm901, %v1587, %v1581
    %v1592 = vadd.f32 %v1576, %v1591
    %v1593 = vadd.f32 %v1577, %v1590
    %v1594 = vadd.f32 %v1578, %v1589
    %v1595 = vadd.f32 %v1579, %v1588
    %v1596 = vadd.f32 %v1592, %v1595
    %v1597 = vadd.f32 %v1593, %v1592
    %v1598 = vadd.f32 %v1594, %v1593
    %v1599 = vadd.f32 %v1595, %v1594
    %v1600 = vadd.f32 %v1596, %v1598
    %v1601 = vadd.f32 %v1597, %v1599
    %v1602 = vmul.f32 %v1478, %v974
    %v1603 = vmul.f32 %v1479, %v974
    %v1604 = vmul.f32 %v1600, %v974
    %v1605 = vmul.f32 %v1601, %v974
    %v1606 = vmul.f32 %v1602, %v1602
    %v1607 = vmul.f32 %v1603, %v1603
    %v1608 = vsub.f32 %v1604, %v1606
    %v1609 = vsub.f32 %v1605, %v1607
    %v1610 = vadd.f32 %v1608, 1e-05
    %v1611 = vadd.f32 %v1609, 1e-05
    %v1612 = vrsqrt.pop %v1610
    %v1613 = vrsqrt.pop %v1611
    %v1616 = vcombine.low %v1612, %v1613
    %v1618 = vunpack.c.l.s4 1966171168
    %v1619 = vunpack.c.0.s8 %v1618
    %v1620 = vlaneseq
    %v1621 = vshrl.u32 %v1620, 7
    %v1622 = vsub.s32 %v1619, %v1621
    %v1623 = vrot.slane %v1616, %v1622
    %v1624 = vcombine.low %v1623, %v1623
    %v1626 = vunpack.c.l.s4 1966171168
    %v1627 = vunpack.c.0.s8 %v1626
    %v1628 = vlaneseq
    %v1629 = vshrl.u32 %v1628, 7
    %v1630 = vsub.s32 %v1627, %v1629
    %v1631 = vrot.slane %v1624, %v1630
    %v1633 = vmul.f32 %v1372, %v1631
    %v1635 = vlaneseq
    %v1636 = vshrl.u32 %v1635, 7
    %v1637 = vsub.s32 0, %v1636
    %v1638 = vrot.slane %v1633, %v1637
    %v1639 = vlaneseq
    %v1640 = vshrl.u32 %v1639, 7
    %v1641 = vsub.s32 1, %v1640
    %v1642 = vrot.slane %v1633, %v1641
    %v1643 = vlaneseq
    %v1644 = vshrl.u32 %v1643, 7
    %v1645 = vsub.s32 2, %v1644
    %v1646 = vrot.slane %v1633, %v1645
    %v1647 = vlaneseq
    %v1648 = vshrl.u32 %v1647, 7
    %v1649 = vsub.s32 3, %v1648
    %v1650 = vrot.slane %v1633, %v1649
    %v1655 = vmul.f32 %v1602, %v1638
    %v1656 = vmul.f32 %v1603, %v1642
    %v1657 = vmul.f32 %v1602, %v1646
    %v1658 = vmul.f32 %v1603, %v1650
    %v1663 = vcombine.low %v1655, %v1656
    %v1664 = vcombine.low %v1657, %v1658
    %v1666 = vunpack.c.l.s4 1966171168
    %v1667 = vunpack.c.0.s8 %v1666
    %v1668 = vlaneseq
    %v1669 = vshrl.u32 %v1668, 7
    %v1670 = vsub.s32 %v1667, %v1669
    %v1671 = vrot.slane %v1663, %v1670
    %v1673 = vunpack.c.l.s4 1966171168
    %v1674 = vunpack.c.0.s8 %v1673
    %v1675 = vlaneseq
    %v1676 = vshrl.u32 %v1675, 7
    %v1677 = vsub.s32 %v1674, %v1676
    %v1678 = vrot.slane %v1664, %v1677
    %v1679 = vcombine.low %v1671, %v1678
    %v1681 = vunpack.c.l.s4 1966171168
    %v1682 = vunpack.c.0.s8 %v1681
    %v1683 = vlaneseq
    %v1684 = vshrl.u32 %v1683, 7
    %v1685 = vsub.s32 %v1682, %v1684
    %v1686 = vrot.slane %v1679, %v1685
    %v1688 = vsub.f32 %v1373, %v1686
    %v1689 = vmul.f32 %v1261, %v1638
    %v1690 = vmul.f32 %v1263, %v1642
    %v1691 = vmul.f32 %v1350, %v1646
    %v1692 = vmul.f32 %v1352, %v1650
    %v1693 = vmul.f32 %v1267, %v1638
    %v1694 = vmul.f32 %v1269, %v1642
    %v1695 = vmul.f32 %v1356, %v1646
    %v1696 = vmul.f32 %v1358, %v1650
    %v1697 = vmul.f32 %v1273, %v1638
    %v1698 = vmul.f32 %v1275, %v1642
    %v1699 = vmul.f32 %v1362, %v1646
    %v1700 = vmul.f32 %v1364, %v1650
    %v1701 = vmul.f32 %v1279, %v1638
    %v1702 = vmul.f32 %v1281, %v1642
    %v1703 = vmul.f32 %v1368, %v1646
    %v1704 = vmul.f32 %v1370, %v1650
    %v1706 = vlaneseq
    %v1707 = vshrl.u32 %v1706, 7
    %v1708 = vsub.s32 0, %v1707
    %v1709 = vrot.slane %v1688, %v1708
    %v1710 = vlaneseq
    %v1711 = vshrl.u32 %v1710, 7
    %v1712 = vsub.s32 1, %v1711
    %v1713 = vrot.slane %v1688, %v1712
    %v1714 = vlaneseq
    %v1715 = vshrl.u32 %v1714, 7
    %v1716 = vsub.s32 2, %v1715
    %v1717 = vrot.slane %v1688, %v1716
    %v1718 = vlaneseq
    %v1719 = vshrl.u32 %v1718, 7
    %v1720 = vsub.s32 3, %v1719
    %v1721 = vrot.slane %v1688, %v1720
    %v1726 = vadd.f32 %v1689, %v1709
    %v1727 = vadd.f32 %v1690, %v1713
    %v1728 = vadd.f32 %v1691, %v1717
    %v1729 = vadd.f32 %v1692, %v1721
    %v1730 = vadd.f32 %v1693, %v1709
    %v1731 = vadd.f32 %v1694, %v1713
    %v1732 = vadd.f32 %v1695, %v1717
    %v1733 = vadd.f32 %v1696, %v1721
    %v1734 = vadd.f32 %v1697, %v1709
    %v1735 = vadd.f32 %v1698, %v1713
    %v1736 = vadd.f32 %v1699, %v1717
    %v1737 = vadd.f32 %v1700, %v1721
    %v1738 = vadd.f32 %v1701, %v1709
    %v1739 = vadd.f32 %v1702, %v1713
    %v1740 = vadd.f32 %v1703, %v1717
    %v1741 = vadd.f32 %v1704, %v1721
    %v1742 = vmax.f32 %v1726, 0.0
    %v1743 = vmax.f32 %v1727, 0.0
    %v1744 = vmax.f32 %v1728, 0.0
    %v1745 = vmax.f32 %v1729, 0.0
    %v1746 = vmax.f32 %v1730, 0.0
    %v1747 = vmax.f32 %v1731, 0.0
    %v1748 = vmax.f32 %v1732, 0.0
    %v1749 = vmax.f32 %v1733, 0.0
    %v1750 = vmax.f32 %v1734, 0.0
    %v1751 = vmax.f32 %v1735, 0.0
    %v1752 = vmax.f32 %v1736, 0.0
    %v1753 = vmax.f32 %v1737, 0.0
    %v1754 = vmax.f32 %v1738, 0.0
    %v1755 = vmax.f32 %v1739, 0.0
    %v1756 = vmax.f32 %v1740, 0.0
    %v1757 = vmax.f32 %v1741, 0.0
    %1758 = vst [vmem:[#allocation5] sm:$0xff] %v1742
    %1759 = vst [vmem:[#allocation5 + $0x8] sm:$0xff] %v1743
    %1760 = vst [vmem:[#allocation5 + $0x10] sm:$0xff] %v1744
    %1761 = vst [vmem:[#allocation5 + $0x18] sm:$0xff] %v1745
    %1762 = vst [vmem:[#allocation5 + $0x20] sm:$0xff] %v1746
    %1763 = vst [vmem:[#allocation5 + $0x28] sm:$0xff] %v1747
    %1764 = vst [vmem:[#allocation5 + $0x30] sm:$0xff] %v1748
    %1765 = vst [vmem:[#allocation5 + $0x38] sm:$0xff] %v1749
    %1766 = vst [vmem:[#allocation5 + $0x40] sm:$0xff] %v1750
    %1767 = vst [vmem:[#allocation5 + $0x48] sm:$0xff] %v1751
    %1768 = vst [vmem:[#allocation5 + $0x50] sm:$0xff] %v1752
    %1769 = vst [vmem:[#allocation5 + $0x58] sm:$0xff] %v1753
    %1770 = vst [vmem:[#allocation5 + $0x60] sm:$0xff] %v1754
    %1771 = vst [vmem:[#allocation5 + $0x68] sm:$0xff] %v1755
    %1772 = vst [vmem:[#allocation5 + $0x70] sm:$0xff] %v1756
    %1773 = vst [vmem:[#allocation5 + $0x78] sm:$0xff] %v1757
    // Predicated region
    $region50: #{tpu_custom_call.1} parent=1 // pred_check
      _
    $region51: #{tpu_custom_call.1} parent=1 // pred_check_branch
      %1775 = sbr.rel (0) target = $region53
    $region52: #{tpu_custom_call.1} parent=1 // pred_region
      %s1777 = ssub.s32 2048, 2048
      %1778 = vsyncadd [#allocation4], %s1777
      %s1779 = sshll.u32 [#allocation5], 4
      %s1780 = int_to_ptr.vmem [resolvable:$true] %s1779
      %1785 = dma.vmem_to_hbm [thread:$0]  %s1780, 2048, %s11, [#allocation4], 512, 512, 32
    $region53: #{tpu_custom_call.1} parent=1 // pred_fallthru
      _
    // Predicated region
    $region54: #{tpu_custom_call.1} parent=1 // pred_check
      _
    $region55: #{tpu_custom_call.1} parent=1 // pred_check_branch
      %1787 = sbr.rel (0) target = $region57
    $region56: #{tpu_custom_call.1} parent=1 // pred_region
      %1788 = dma.done [#allocation4], 2048
    $region57: #{tpu_custom_call.1} parent=1 // pred_fallthru
      _
    %1789 = vsyncpa [#allocation3], 1
    %1790 = vsyncpa [#allocation4], 1

</llo_original>
